<compile_context>
chip_gen: v7x
topology: tpu7x:2x2x1
jax: 0.10.0
libtpu: 0.0.40
codegen_flags: <defaults>
</compile_context>

<pallas_src>
import functools

import jax
import jax.numpy as jnp
from jax.experimental import pallas as pl
from jax.experimental.pallas import tpu as pltpu


# ----------------------------------------------------------------------------
# Small helpers.
# ----------------------------------------------------------------------------
def _cdiv(a, b):
    return -(-a // b)


def _round_up(a, m):
    return _cdiv(a, m) * m


@functools.lru_cache(maxsize=None)
def _vmem_limit_bytes():
    """Generation-aware VMEM limit: 3/4 of physical (48 MiB on v7x's 64 MiB,
    96 MiB on v5e/v6e's 128 MiB). Falls back to a conservative 64 MiB-core
    assumption if the query is unavailable."""
    cap = 64 << 20
    try:
        info = pltpu.get_tpu_info()
        cap = int(getattr(info, "vmem_capacity_bytes", cap)) or cap
    except Exception:
        pass
    return min((cap * 3) // 4, 96 << 20)


def _block_budget_bytes():
    # Budget for the (double-buffered) pipelined blocks; leave half of the
    # limit for Mosaic internal scratch / headroom.
    return _vmem_limit_bytes() // 2


def _spectral_plan(Mtot, B, Cin, Cout):
    """Mode-tile size and padded mode count for the packed spectral matmul.
    VMEM accounting is sublane/lane-padding aware (bf16 tiles to (16,128),
    f32 to (8,128)); every tiled block is double-buffered."""
    budget = _block_budget_bytes()
    lhs = 2 * _round_up(2 * B, 16) * _round_up(Cin, 128)           # bf16 LHS
    rhs = 2 * _round_up(Cin, 16) * _round_up(2 * Cout, 128)        # bf16 RHS
    out = 2 * 4 * _round_up(B, 8) * _round_up(Cout, 128)           # 2x f32 out
    per_mode = 2 * (lhs + rhs + out)                               # dbl-buffer
    tm_cap = max(1, budget // per_mode)
    # >= 2 and even grid steps so the "parallel" mode axis shards evenly
    # across both v7x TensorCores; pad the mode axis instead of collapsing
    # the tile to an awkward divisor of Mtot.
    steps = _round_up(max(2, _cdiv(Mtot, tm_cap)), 2)
    tm = _cdiv(Mtot, steps)
    return tm, steps * tm


def _conv_plan(HW, Cin, Cout):
    """Lane-dense spatial tile for the fused 1x1-conv kernel."""
    budget = _block_budget_bytes()
    # per spatial column (f32 x, fourier residual, output; double-buffered)
    per_col = 2 * 4 * (_round_up(Cin, 8) + 2 * _round_up(Cout, 8))
    cap = max(128, min(budget // per_col, 16384) // 128 * 128)
    if HW % 128 == 0:
        # Largest 128-multiple divisor of HW that fits: no jnp.pad HBM copies.
        thw = 128
        d = 256
        while d <= min(HW, cap):
            if HW % d == 0:
                thw = d
            d += 128
        return thw, HW
    # TODO(synk): the ragged tail could use a masked store on the last tile
    # instead of padding; pad only when H*W is not 128-aligned.
    thw = min(cap, _round_up(HW, 128))
    return thw, _round_up(HW, thw)


# ----------------------------------------------------------------------------
# In-kernel exact (erf-based) GELU.  PyTorch nn.GELU() default is the exact
# erf formulation; erf uses Abramowitz & Stegun 7.1.26 (|abs err| ~ 1.5e-7).
# The reciprocal goes to the EUP (free slot when MXU/store-bound).
# ----------------------------------------------------------------------------
def _erf(x):
    ax = jnp.abs(x)
    t = pl.reciprocal(1.0 + 0.3275911 * ax, approx=True)
    poly = t * (0.254829592
                + t * (-0.284496736
                       + t * (1.421413741
                              + t * (-1.453152027 + t * 1.061405429))))
    y = 1.0 - poly * jnp.exp(-ax * ax)
    return jnp.where(x >= 0.0, y, -y)


def _gelu_exact(x):
    return 0.5 * x * (1.0 + _erf(x * 0.7071067811865476))


# ----------------------------------------------------------------------------
# Kernel 1: packed complex spectral channel mixing.
#   xp: (tm, 2B, Cin) bf16  = [xr ; xi]
#   wp: (tm, Cin, 2Co) bf16 = [wr | wi]
#   one batched MXU matmul -> quadrants of the complex product.
# ----------------------------------------------------------------------------
def _spectral_mix_kernel(xp_ref, wp_ref, or_ref, oi_ref, *, B, Cout):
    q = jnp.einsum("mbi,mio->mbo", xp_ref[...], wp_ref[...],
                   preferred_element_type=jnp.float32)
    or_ref[...] = q[:, :B, :Cout] - q[:, B:, Cout:]    # xr@wr - xi@wi
    oi_ref[...] = q[:, :B, Cout:] + q[:, B:, :Cout]    # xr@wi + xi@wr


def _spectral_mix(xp, wp, B, Cout, tm):
    Mpad, twoB, Cin = xp.shape
    grid = (Mpad // tm,)
    flops = 2 * Mpad * twoB * Cin * 2 * Cout + 2 * Mpad * B * Cout
    bytes_accessed = (2 * Mpad * twoB * Cin + 2 * Mpad * Cin * 2 * Cout
                      + 2 * 4 * Mpad * B * Cout)
    kern = functools.partial(_spectral_mix_kernel, B=B, Cout=Cout)
    return pl.pallas_call(
        kern,
        out_shape=(jax.ShapeDtypeStruct((Mpad, B, Cout), jnp.float32),
                   jax.ShapeDtypeStruct((Mpad, B, Cout), jnp.float32)),
        grid=grid,
        in_specs=[
            pl.BlockSpec((tm, twoB, Cin), lambda m: (m, 0, 0)),
            pl.BlockSpec((tm, Cin, 2 * Cout), lambda m: (m, 0, 0)),
        ],
        out_specs=(
            pl.BlockSpec((tm, B, Cout), lambda m: (m, 0, 0)),
            pl.BlockSpec((tm, B, Cout), lambda m: (m, 0, 0)),
        ),
        compiler_params=pltpu.CompilerParams(
            dimension_semantics=("parallel",),
            vmem_limit_bytes=_vmem_limit_bytes()),
        cost_estimate=pl.CostEstimate(flops=flops, transcendentals=0,
                                      bytes_accessed=bytes_accessed),
    )(xp, wp)


# ----------------------------------------------------------------------------
# Kernel 2: 1x1 conv (channel matmul) + bias + residual add + exact GELU.
#   per block: (Cout, Cin) @ (Cin, thw) + b + fourier -> gelu -> (Cout, thw)
# ----------------------------------------------------------------------------
def _conv1x1_add_gelu_kernel(x_ref, w_ref, b_ref, f_ref, o_ref):
    x = x_ref[...].astype(jnp.bfloat16)                 # bf16 MXU, f32 accum
    y = jnp.dot(w_ref[...], x, preferred_element_type=jnp.float32)
    y = y + b_ref[...] + f_ref[...]
    o_ref[...] = _gelu_exact(y).astype(o_ref.dtype)


def _conv1x1_add_gelu(x_nchw, fourier_nchw, w_bf16, b_col):
    """activation(fourier + conv1x1(x)), all fused in one Pallas kernel."""
    B, Cin, H, W = x_nchw.shape
    Cout = w_bf16.shape[0]
    HW = H * W
    x3 = x_nchw.reshape(B, Cin, HW)
    f3 = fourier_nchw.reshape(B, Cout, HW)

    thw, HWp = _conv_plan(HW, Cin, Cout)
    if HWp != HW:
        x3 = jnp.pad(x3, ((0, 0), (0, 0), (0, HWp - HW)))
        f3 = jnp.pad(f3, ((0, 0), (0, 0), (0, HWp - HW)))

    grid = (B, HWp // thw)
    flops = 2 * B * Cout * Cin * HWp + 8 * B * Cout * HWp
    bytes_accessed = (4 * (B * Cin * HWp + 2 * B * Cout * HWp + Cout)
                      + 2 * Cout * Cin)

    out3 = pl.pallas_call(
        _conv1x1_add_gelu_kernel,
        out_shape=jax.ShapeDtypeStruct((B, Cout, HWp), jnp.float32),
        grid=grid,
        in_specs=[
            pl.BlockSpec((None, Cin, thw), lambda bb, j: (bb, 0, j)),
            pl.BlockSpec((Cout, Cin), lambda bb, j: (0, 0)),
            pl.BlockSpec((Cout, 1), lambda bb, j: (0, 0)),
            pl.BlockSpec((None, Cout, thw), lambda bb, j: (bb, 0, j)),
        ],
        out_specs=pl.BlockSpec((None, Cout, thw), lambda bb, j: (bb, 0, j)),
        compiler_params=pltpu.CompilerParams(
            dimension_semantics=("parallel", "parallel"),
            vmem_limit_bytes=_vmem_limit_bytes()),
        cost_estimate=pl.CostEstimate(flops=flops,
                                      transcendentals=2 * B * Cout * HWp,
                                      bytes_accessed=bytes_accessed),
    )(x3, w_bf16, b_col, f3)
    if HWp != HW:
        out3 = out3[:, :, :HW]
    return out3.reshape(B, Cout, H, W)


# ----------------------------------------------------------------------------
# SpectralConv2d forward (FFT glue in JAX, packed mode mixing in Pallas).
# ----------------------------------------------------------------------------
def _spectral_conv2d(x, wp, modes1, modes2):
    B, Cin, H, W = x.shape
    Mprep, _, twoCout = wp.shape
    Cout = twoCout // 2
    Wf = W // 2 + 1
    Mtot = 2 * modes1 * modes2

    x_ft = jnp.fft.rfft2(x)                                    # (B,Cin,H,Wf)
    reg = jnp.concatenate([x_ft[:, :, :modes1, :modes2],
                           x_ft[:, :, H - modes1:, :modes2]], axis=2)
    reg = reg.reshape(B, Cin, Mtot)
    # Pack real/imag on the (sublane) batch axis: (Mtot, 2B, Cin), bf16.
    xp = jnp.concatenate([jnp.real(reg), jnp.imag(reg)], axis=0)  # (2B,Cin,M)
    xp = jnp.transpose(xp, (2, 0, 1)).astype(jnp.bfloat16)        # (M,2B,Cin)

    tm, Mpad = _spectral_plan(Mtot, B, Cin, Cout)
    if Mpad != Mprep:
        # Fallback only if runtime batch differs from prepare_params batch.
        wp = jnp.pad(wp[:Mtot], ((0, Mpad - Mtot), (0, 0), (0, 0)))
    if Mpad != Mtot:
        xp = jnp.pad(xp, ((0, Mpad - Mtot), (0, 0), (0, 0)))

    out_r, out_i = _spectral_mix(xp, wp, B, Cout, tm)          # (Mpad,B,Cout)
    out = jax.lax.complex(out_r[:Mtot], out_i[:Mtot])
    out = jnp.transpose(out, (1, 2, 0)).reshape(B, Cout, 2 * modes1, modes2)

    out_ft = jnp.zeros((B, Cout, H, Wf), jnp.complex64)
    out_ft = out_ft.at[:, :, :modes1, :modes2].set(out[:, :, :modes1, :])
    out_ft = out_ft.at[:, :, H - modes1:, :modes2].set(out[:, :, modes1:, :])
    return jnp.fft.irfft2(out_ft, s=(H, W))                    # float32 NCHW


# ----------------------------------------------------------------------------
# FourierBasicBlock forward.
# ----------------------------------------------------------------------------
def fourier_basic_block(x, prep, modes1, modes2):
    x1 = _spectral_conv2d(x, prep["f1_wp"], modes1, modes2)
    out = _conv1x1_add_gelu(x, x1, prep["conv1_w"], prep["conv1_b"])
    x1 = _spectral_conv2d(out, prep["f2_wp"], modes1, modes2)
    out = _conv1x1_add_gelu(out, x1, prep["conv2_w"], prep["conv2_b"])
    return out


def init_params(key, in_planes, planes, modes1, modes2):
    """PyTorch-layout parameters (same init semantics as the nn.Module)."""
    ks = jax.random.split(key, 8)
    s1 = 1.0 / (in_planes * planes)
    s2 = 1.0 / (planes * planes)
    f1_w1 = s1 * jax.random.uniform(
        ks[0], (in_planes, planes, modes1, modes2, 2), jnp.float32)
    f1_w2 = s1 * jax.random.uniform(
        ks[1], (in_planes, planes, modes1, modes2, 2), jnp.float32)
    f2_w1 = s2 * jax.random.uniform(
        ks[2], (planes, planes, modes1, modes2, 2), jnp.float32)
    f2_w2 = s2 * jax.random.uniform(
        ks[3], (planes, planes, modes1, modes2, 2), jnp.float32)
    b1 = 1.0 / (in_planes ** 0.5)
    conv1_w = jax.random.uniform(ks[4], (planes, in_planes), jnp.float32, -b1, b1)
    conv1_b = jax.random.uniform(ks[5], (planes,), jnp.float32, -b1, b1)
    b2 = 1.0 / (planes ** 0.5)
    conv2_w = jax.random.uniform(ks[6], (planes, planes), jnp.float32, -b2, b2)
    conv2_b = jax.random.uniform(ks[7], (planes,), jnp.float32, -b2, b2)
    return dict(f1_w1=f1_w1, f1_w2=f1_w2, f2_w1=f2_w1, f2_w2=f2_w2,
                conv1_w=conv1_w, conv1_b=conv1_b,
                conv2_w=conv2_w, conv2_b=conv2_b)


def prepare_params(params, modes1, modes2, batch):
    """One-time re-layout of parameters into kernel form:
      * spectral weights packed to (Mpad, Cin, 2*Cout) bf16 ([wr | wi] lanes),
        both corner-mode regions fused on the (padded) mode axis -> no
        per-forward HBM weight transposes,
      * 1x1 conv weight bf16, bias as an (Cout, 1) f32 column."""
    Mtot = 2 * modes1 * modes2

    def pack(w1, w2):
        Cin, Cout = w1.shape[0], w1.shape[1]
        wr = jnp.concatenate([w1[..., 0], w2[..., 0]], axis=2)  # (Ci,Co,2m1,m2)
        wi = jnp.concatenate([w1[..., 1], w2[..., 1]], axis=2)
        wr = jnp.transpose(wr.reshape(Cin, Cout, Mtot), (2, 0, 1))
        wi = jnp.transpose(wi.reshape(Cin, Cout, Mtot), (2, 0, 1))
        wp = jnp.concatenate([wr, wi], axis=2).astype(jnp.bfloat16)
        _, Mpad = _spectral_plan(Mtot, batch, Cin, Cout)
        if Mpad != Mtot:
            wp = jnp.pad(wp, ((0, Mpad - Mtot), (0, 0), (0, 0)))
        return wp

    return dict(
        f1_wp=pack(params["f1_w1"], params["f1_w2"]),
        f2_wp=pack(params["f2_w1"], params["f2_w2"]),
        conv1_w=params["conv1_w"].astype(jnp.bfloat16),
        conv1_b=params["conv1_b"].reshape(-1, 1).astype(jnp.float32),
        conv2_w=params["conv2_w"].astype(jnp.bfloat16),
        conv2_b=params["conv2_b"].reshape(-1, 1).astype(jnp.float32),
    )


if __name__ == "__main__":
    B, IN_PLANES, PLANES, H, W = 2, 4, 4, 16, 16
    MODES1, MODES2 = 4, 4        # modes1 <= H//2, modes2 <= W//2+1

    key = jax.random.PRNGKey(0)
    pkey, xkey = jax.random.split(key)
    params = init_params(pkey, IN_PLANES, PLANES, MODES1, MODES2)
    prep = prepare_params(params, MODES1, MODES2, batch=B)
    x = jax.random.normal(xkey, (B, IN_PLANES, H, W), jnp.float32)

    fwd = jax.jit(functools.partial(fourier_basic_block,
                                    modes1=MODES1, modes2=MODES2))
    out = fwd(x, prep)
    jax.block_until_ready(out)
    assert out.shape == (B, PLANES, H, W), out.shape
    assert out.dtype == jnp.float32
    print("KERNEL_OK")
</pallas_src>

<mosaic_0001>
module attributes {stable_mosaic.version = 11 : i64} {
  func.func @_spectral_mix_kernel(%arg0: i32, %arg1: memref<16x4x4xbf16, #tpu.memory_space<vmem>>, %arg2: memref<16x4x8xbf16, #tpu.memory_space<vmem>>, %arg3: memref<16x2x4xf32, #tpu.memory_space<vmem>>, %arg4: memref<16x2x4xf32, #tpu.memory_space<vmem>>) attributes {dimension_semantics = [#tpu.dimension_semantics<parallel>], iteration_bounds = array<i64: 2>, scalar_prefetch = 0 : i64, scratch_operands = 0 : i64, tpu.core_type = #tpu.core_type<tc>, window_params = [{transform_indices = @transform_0, window_bounds = array<i64: 16, 4, 4>}, {transform_indices = @transform_1, window_bounds = array<i64: 16, 4, 8>}, {transform_indices = @transform_2, window_bounds = array<i64: 16, 2, 4>}, {transform_indices = @transform_3, window_bounds = array<i64: 16, 2, 4>}]} {
    %c0 = arith.constant 0 : index
    %c0_0 = arith.constant 0 : index
    %c0_1 = arith.constant 0 : index
    %0 = vector.load %arg1[%c0, %c0_0, %c0_1] : memref<16x4x4xbf16, #tpu.memory_space<vmem>>, vector<16x4x4xbf16>
    %c0_2 = arith.constant 0 : index
    %c0_3 = arith.constant 0 : index
    %c0_4 = arith.constant 0 : index
    %1 = vector.load %arg2[%c0_2, %c0_3, %c0_4] : memref<16x4x8xbf16, #tpu.memory_space<vmem>>, vector<16x4x8xbf16>
    "tpu.trace_start"() <{level = 10 : i32, message = "mbi,mio->mbo"}> : () -> ()
    %cst = arith.constant dense<0.000000e+00> : vector<16x4x8xf32>
    %2 = tpu.matmul %0, %1, %cst {dimension_numbers = #tpu.dot_dimension_numbers<[2], [1], [1], [2], [0, 0, 0, 1, 1, 2], [0], [0]>} : vector<16x4x4xbf16>, vector<16x4x8xbf16>, vector<16x4x8xf32> -> vector<16x4x8xf32>
    "tpu.trace_stop"() : () -> ()
    %3 = vector.extract_strided_slice %2 {offsets = [0, 0, 0], sizes = [16, 2, 4], strides = [1, 1, 1]} : vector<16x4x8xf32> to vector<16x2x4xf32>
    %4 = vector.extract_strided_slice %2 {offsets = [0, 2, 4], sizes = [16, 2, 4], strides = [1, 1, 1]} : vector<16x4x8xf32> to vector<16x2x4xf32>
    %5 = arith.subf %3, %4 : vector<16x2x4xf32>
    %c0_5 = arith.constant 0 : index
    %c0_6 = arith.constant 0 : index
    %c0_7 = arith.constant 0 : index
    %6 = vector.load %arg3[%c0_5, %c0_6, %c0_7] : memref<16x2x4xf32, #tpu.memory_space<vmem>>, vector<16x2x4xf32>
    tpu.vector_store %arg3[%c0_5, %c0_6, %c0_7], %5 {strides = array<i32>} : memref<16x2x4xf32, #tpu.memory_space<vmem>>, vector<16x2x4xf32>,
    %7 = vector.extract_strided_slice %2 {offsets = [0, 0, 4], sizes = [16, 2, 4], strides = [1, 1, 1]} : vector<16x4x8xf32> to vector<16x2x4xf32>
    %8 = vector.extract_strided_slice %2 {offsets = [0, 2, 0], sizes = [16, 2, 4], strides = [1, 1, 1]} : vector<16x4x8xf32> to vector<16x2x4xf32>
    %9 = arith.addf %7, %8 : vector<16x2x4xf32>
    %c0_8 = arith.constant 0 : index
    %c0_9 = arith.constant 0 : index
    %c0_10 = arith.constant 0 : index
    %10 = vector.load %arg4[%c0_8, %c0_9, %c0_10] : memref<16x2x4xf32, #tpu.memory_space<vmem>>, vector<16x2x4xf32>
    tpu.vector_store %arg4[%c0_8, %c0_9, %c0_10], %9 {strides = array<i32>} : memref<16x2x4xf32, #tpu.memory_space<vmem>>, vector<16x2x4xf32>,
    return
  }
  func.func @transform_0(%arg0: i32) -> (i32, i32, i32) {
    %c0_i32 = arith.constant 0 : i32
    %c0_i32_0 = arith.constant 0 : i32
    %c0_i32_1 = arith.constant 0 : i32
    return %arg0, %c0_i32, %c0_i32_0 : i32, i32, i32
  }
  func.func @transform_1(%arg0: i32) -> (i32, i32, i32) {
    %c0_i32 = arith.constant 0 : i32
    %c0_i32_0 = arith.constant 0 : i32
    %c0_i32_1 = arith.constant 0 : i32
    return %arg0, %c0_i32, %c0_i32_0 : i32, i32, i32
  }
  func.func @transform_2(%arg0: i32) -> (i32, i32, i32) {
    %c0_i32 = arith.constant 0 : i32
    %c0_i32_0 = arith.constant 0 : i32
    %c0_i32_1 = arith.constant 0 : i32
    return %arg0, %c0_i32, %c0_i32_0 : i32, i32, i32
  }
  func.func @transform_3(%arg0: i32) -> (i32, i32, i32) {
    %c0_i32 = arith.constant 0 : i32
    %c0_i32_0 = arith.constant 0 : i32
    %c0_i32_1 = arith.constant 0 : i32
    return %arg0, %c0_i32, %c0_i32_0 : i32, i32, i32
  }
}

module attributes {stable_mosaic.version = 11 : i64} {
  func.func @_conv1x1_add_gelu_kernel(%arg0: i32, %arg1: i32, %arg2: memref<1x4x256xf32, #tpu.memory_space<vmem>>, %arg3: memref<4x4xbf16, #tpu.memory_space<vmem>>, %arg4: memref<4x1xf32, #tpu.memory_space<vmem>>, %arg5: memref<1x4x256xf32, #tpu.memory_space<vmem>>, %arg6: memref<1x4x256xf32, #tpu.memory_space<vmem>>) attributes {dimension_semantics = [#tpu.dimension_semantics<parallel>, #tpu.dimension_semantics<parallel>], iteration_bounds = array<i64: 2, 1>, scalar_prefetch = 0 : i64, scratch_operands = 0 : i64, tpu.core_type = #tpu.core_type<tc>, window_params = [{transform_indices = @transform_0, window_bounds = array<i64: 1, 4, 256>}, {pipeline_mode = #tpu.pipeline_mode<synchronous>, transform_indices = @transform_1, window_bounds = array<i64: 4, 4>}, {pipeline_mode = #tpu.pipeline_mode<synchronous>, transform_indices = @transform_2, window_bounds = array<i64: 4, 1>}, {transform_indices = @transform_3, window_bounds = array<i64: 1, 4, 256>}, {transform_indices = @transform_4, window_bounds = array<i64: 1, 4, 256>}]} {
    %c0 = arith.constant 0 : index
    %c0_0 = arith.constant 0 : index
    %c0_1 = arith.constant 0 : index
    %0 = vector.load %arg2[%c0, %c0_0, %c0_1] : memref<1x4x256xf32, #tpu.memory_space<vmem>>, vector<1x4x256xf32>
    %1 = vector.shape_cast %0 : vector<1x4x256xf32> to vector<4x256xf32>
    %2 = arith.truncf %1 : vector<4x256xf32> to vector<4x256xbf16>
    %c0_2 = arith.constant 0 : index
    %c0_3 = arith.constant 0 : index
    %3 = vector.load %arg3[%c0_2, %c0_3] : memref<4x4xbf16, #tpu.memory_space<vmem>>, vector<4x4xbf16>
    %cst = arith.constant dense<0.000000e+00> : vector<4x256xf32>
    %4 = tpu.matmul %3, %2, %cst {dimension_numbers = #tpu.dot_dimension_numbers<[1], [0], [0], [1], [0, 0, 1, 1], [], []>} : vector<4x4xbf16>, vector<4x256xbf16>, vector<4x256xf32> -> vector<4x256xf32>
    %c0_4 = arith.constant 0 : index
    %c0_5 = arith.constant 0 : index
    %5 = vector.load %arg4[%c0_4, %c0_5] : memref<4x1xf32, #tpu.memory_space<vmem>>, vector<4x1xf32>
    %6 = vector.broadcast %5 : vector<4x1xf32> to vector<4x256xf32>
    %7 = arith.addf %4, %6 : vector<4x256xf32>
    %c0_6 = arith.constant 0 : index
    %c0_7 = arith.constant 0 : index
    %c0_8 = arith.constant 0 : index
    %8 = vector.load %arg5[%c0_6, %c0_7, %c0_8] : memref<1x4x256xf32, #tpu.memory_space<vmem>>, vector<1x4x256xf32>
    %9 = vector.shape_cast %8 : vector<1x4x256xf32> to vector<4x256xf32>
    %10 = arith.addf %7, %9 : vector<4x256xf32>
    %cst_9 = arith.constant 5.000000e-01 : f32
    %11 = vector.broadcast %cst_9 : f32 to vector<4x256xf32>
    %12 = arith.mulf %11, %10 : vector<4x256xf32>
    %cst_10 = arith.constant 0.707106769 : f32
    %13 = vector.broadcast %cst_10 : f32 to vector<4x256xf32>
    %14 = arith.mulf %10, %13 : vector<4x256xf32>
    %15 = math.absf %14 : vector<4x256xf32>
    %cst_11 = arith.constant 0.327591091 : f32
    %16 = vector.broadcast %cst_11 : f32 to vector<4x256xf32>
    %17 = arith.mulf %16, %15 : vector<4x256xf32>
    %cst_12 = arith.constant 1.000000e+00 : f32
    %18 = vector.broadcast %cst_12 : f32 to vector<4x256xf32>
    %19 = arith.addf %18, %17 : vector<4x256xf32>
    %20 = tpu.reciprocal %19 {approx = true} : vector<4x256xf32> -> vector<4x256xf32>
    %cst_13 = arith.constant 1.06140542 : f32
    %21 = vector.broadcast %cst_13 : f32 to vector<4x256xf32>
    %22 = arith.mulf %20, %21 : vector<4x256xf32>
    %cst_14 = arith.constant -1.45315206 : f32
    %23 = vector.broadcast %cst_14 : f32 to vector<4x256xf32>
    %24 = arith.addf %23, %22 : vector<4x256xf32>
    %25 = arith.mulf %20, %24 : vector<4x256xf32>
    %cst_15 = arith.constant 1.42141378 : f32
    %26 = vector.broadcast %cst_15 : f32 to vector<4x256xf32>
    %27 = arith.addf %26, %25 : vector<4x256xf32>
    %28 = arith.mulf %20, %27 : vector<4x256xf32>
    %cst_16 = arith.constant -0.284496725 : f32
    %29 = vector.broadcast %cst_16 : f32 to vector<4x256xf32>
    %30 = arith.addf %29, %28 : vector<4x256xf32>
    %31 = arith.mulf %20, %30 : vector<4x256xf32>
    %cst_17 = arith.constant 0.254829586 : f32
    %32 = vector.broadcast %cst_17 : f32 to vector<4x256xf32>
    %33 = arith.addf %32, %31 : vector<4x256xf32>
    %34 = arith.mulf %20, %33 : vector<4x256xf32>
    %cst_18 = arith.constant 0.000000e+00 : f32
    %35 = vector.broadcast %cst_18 : f32 to vector<4x256xf32>
    %36 = arith.subf %35, %15 : vector<4x256xf32>
    %37 = arith.mulf %36, %15 : vector<4x256xf32>
    %38 = math.exp %37 : vector<4x256xf32>
    %39 = arith.mulf %34, %38 : vector<4x256xf32>
    %cst_19 = arith.constant 1.000000e+00 : f32
    %40 = vector.broadcast %cst_19 : f32 to vector<4x256xf32>
    %41 = arith.subf %40, %39 : vector<4x256xf32>
    %cst_20 = arith.constant 0.000000e+00 : f32
    %42 = vector.broadcast %cst_20 : f32 to vector<4x256xf32>
    %43 = arith.cmpf oge, %14, %42 : vector<4x256xf32>
    %cst_21 = arith.constant 0.000000e+00 : f32
    %44 = vector.broadcast %cst_21 : f32 to vector<4x256xf32>
    %45 = arith.subf %44, %41 : vector<4x256xf32>
    %46 = arith.select %43, %41, %45 : vector<4x256xi1>, vector<4x256xf32>
    %cst_22 = arith.constant 1.000000e+00 : f32
    %47 = vector.broadcast %cst_22 : f32 to vector<4x256xf32>
    %48 = arith.addf %47, %46 : vector<4x256xf32>
    %49 = arith.mulf %12, %48 : vector<4x256xf32>
    %c0_23 = arith.constant 0 : index
    %c0_24 = arith.constant 0 : index
    %c0_25 = arith.constant 0 : index
    %50 = vector.load %arg6[%c0_23, %c0_24, %c0_25] : memref<1x4x256xf32, #tpu.memory_space<vmem>>, vector<1x4x256xf32>
    %51 = vector.shape_cast %50 : vector<1x4x256xf32> to vector<4x256xf32>
    %52 = vector.shape_cast %49 : vector<4x256xf32> to vector<1x4x256xf32>
    tpu.vector_store %arg6[%c0_23, %c0_24, %c0_25], %52 {strides = array<i32>} : memref<1x4x256xf32, #tpu.memory_space<vmem>>, vector<1x4x256xf32>,
    return
  }
  func.func @transform_0(%arg0: i32, %arg1: i32) -> (i32, i32, i32) {
    %c0_i32 = arith.constant 0 : i32
    %c0_i32_0 = arith.constant 0 : i32
    return %arg0, %c0_i32, %arg1 : i32, i32, i32
  }
  func.func @transform_1(%arg0: i32, %arg1: i32) -> (i32, i32) {
    %c0_i32 = arith.constant 0 : i32
    %c0_i32_0 = arith.constant 0 : i32
    %c0_i32_1 = arith.constant 0 : i32
    return %c0_i32, %c0_i32_0 : i32, i32
  }
  func.func @transform_2(%arg0: i32, %arg1: i32) -> (i32, i32) {
    %c0_i32 = arith.constant 0 : i32
    %c0_i32_0 = arith.constant 0 : i32
    %c0_i32_1 = arith.constant 0 : i32
    return %c0_i32, %c0_i32_0 : i32, i32
  }
  func.func @transform_3(%arg0: i32, %arg1: i32) -> (i32, i32, i32) {
    %c0_i32 = arith.constant 0 : i32
    %c0_i32_0 = arith.constant 0 : i32
    return %arg0, %c0_i32, %arg1 : i32, i32, i32
  }
  func.func @transform_4(%arg0: i32, %arg1: i32) -> (i32, i32, i32) {
    %c0_i32 = arith.constant 0 : i32
    %c0_i32_0 = arith.constant 0 : i32
    return %arg0, %c0_i32, %arg1 : i32, i32, i32
  }
}

</mosaic_0001>

<llo_original>
// kernel: reverse.5
$region0: #{reverse.5}
  %s0 = inlined_call_operand.vmem [shape: f32[2,4,16,7], index: 0, kind: input, shape index: {}]
  %s1 = inlined_call_operand.vmem [shape: f32[2,4,16,7], index: 1, kind: output, shape index: {}]
  $region1: #{reverse.5} parent=0
    #allocation0 [shape = 'u8[65536]{0}', space=vmem, size = 0x10000, scoped, tag = 'operand span for operand 0']
    #allocation1 [shape = 'u8[32768]{0}', space=vmem, size = 0x8000, scoped, tag = 'operand span for operand 1']
    %s2 = scalar_lea.vmem [#allocation0], 8
    // Predicated region
    $region2: #{reverse.5} parent=1 // pred_check
      _
    $region3: #{reverse.5} parent=1 // pred_check_branch
      %4 = sbr.rel (0) target = $region5
    $region4: #{reverse.5} parent=1 // pred_region
      // Predicated region
      $region6: #{reverse.5} parent=4 // pred_check
        _
      $region7: #{reverse.5} parent=4 // pred_check_branch
        %6 = sbr.rel (0) target = $region9
      $region8: #{reverse.5} parent=4 // pred_region
        // Predicated region
        $region21: #{reverse.5} parent=8 // pred_check
          _
        $region22: #{reverse.5} parent=8 // pred_check_branch
          %35 = sbr.rel (0) target = $region24
        $region23: #{reverse.5} parent=8 // pred_region
          loop: start=0, step=1, limit=1
          $region25: #{reverse.5} parent=23 // loop_pre_header
            _
          $region26: #{reverse.5} parent=23 // loop_header
            %s37 = sphi 0, %s41
            %p38 = scmp.ge.s32.totalorder %s37, 1
            %s42 = sphi %s0, %s0
            %s43 = sphi %s2, %s2
          $region27: #{reverse.5} parent=23 // loop_header_branch
            %40 = sbr.rel (%p38) target = $region31
          $region28: #{reverse.5} parent=23 // loop_body
            %v44 = vld [vmem:[%s42] sm:$0xff]
            %45 = vst [vmem:[%s43] sm:$0xff] %v44
            %v46 = vld [vmem:[%s42 + $0x8] sm:$0xff]
            %47 = vst [vmem:[%s43 + $0x10] sm:$0xff] %v46
            %v48 = vld [vmem:[%s42 + $0x10] sm:$0xff]
            %49 = vst [vmem:[%s43 + $0x20] sm:$0xff] %v48
            %v50 = vld [vmem:[%s42 + $0x18] sm:$0xff]
            %51 = vst [vmem:[%s43 + $0x30] sm:$0xff] %v50
            %v52 = vld [vmem:[%s42 + $0x20] sm:$0xff]
            %53 = vst [vmem:[%s43 + $0x40] sm:$0xff] %v52
            %v54 = vld [vmem:[%s42 + $0x28] sm:$0xff]
            %55 = vst [vmem:[%s43 + $0x50] sm:$0xff] %v54
            %v56 = vld [vmem:[%s42 + $0x30] sm:$0xff]
            %57 = vst [vmem:[%s43 + $0x60] sm:$0xff] %v56
            %v58 = vld [vmem:[%s42 + $0x38] sm:$0xff]
            %59 = vst [vmem:[%s43 + $0x70] sm:$0xff] %v58
          $region29: #{reverse.5} parent=23 // loop_footer
            %s41 = sadd.s32 1, %s37
          $region30: #{reverse.5} parent=23 // loop_footer_branch
            %36 = sbr.rel target = $region26
          $region31: #{reverse.5} parent=23 // loop_exit
            _
        $region24: #{reverse.5} parent=8 // pred_fallthru
          _
        // Predicated region
        $region32: #{reverse.5} parent=8 // pred_check
          _
        $region33: #{reverse.5} parent=8 // pred_check_branch
          %61 = sbr.rel target = $region35
        $region34: #{reverse.5} parent=8 // pred_region
          _
        $region35: #{reverse.5} parent=8 // pred_fallthru
          _
      $region9: #{reverse.5} parent=4 // pred_fallthru
        _
      // Predicated region
      $region10: #{reverse.5} parent=4 // pred_check
        _
      $region11: #{reverse.5} parent=4 // pred_check_branch
        %8 = sbr.rel target = $region13
      $region12: #{reverse.5} parent=4 // pred_region
        loop: start=0, step=1, limit=1
        $region14: #{reverse.5} parent=12 // loop_pre_header
          _
        $region15: #{reverse.5} parent=12 // loop_header
          %s11 = sphi 0, %s15
          %p12 = scmp.ge.s32.totalorder %s11, 1
          %s16 = sphi %s0, %s0
          %s17 = sphi %s2, %s2
        $region16: #{reverse.5} parent=12 // loop_header_branch
          %14 = sbr.rel (%p12) target = $region20
        $region17: #{reverse.5} parent=12 // loop_body
          %v18 = vld [vmem:[%s16] sm:$0xff]
          %19 = vst [vmem:[%s17] sm:$0xff] %v18
          %v20 = vld [vmem:[%s16 + $0x8] sm:$0xff]
          %21 = vst [vmem:[%s17 + $0x10] sm:$0xff] %v20
          %v22 = vld [vmem:[%s16 + $0x10] sm:$0xff]
          %23 = vst [vmem:[%s17 + $0x20] sm:$0xff] %v22
          %v24 = vld [vmem:[%s16 + $0x18] sm:$0xff]
          %25 = vst [vmem:[%s17 + $0x30] sm:$0xff] %v24
          %v26 = vld [vmem:[%s16 + $0x20] sm:$0xff]
          %27 = vst [vmem:[%s17 + $0x40] sm:$0xff] %v26
          %v28 = vld [vmem:[%s16 + $0x28] sm:$0xff]
          %29 = vst [vmem:[%s17 + $0x50] sm:$0xff] %v28
          %v30 = vld [vmem:[%s16 + $0x30] sm:$0xff]
          %31 = vst [vmem:[%s17 + $0x60] sm:$0xff] %v30
          %v32 = vld [vmem:[%s16 + $0x38] sm:$0xff]
          %33 = vst [vmem:[%s17 + $0x70] sm:$0xff] %v32
        $region18: #{reverse.5} parent=12 // loop_footer
          %s15 = sadd.s32 1, %s11
        $region19: #{reverse.5} parent=12 // loop_footer_branch
          %10 = sbr.rel target = $region15
        $region20: #{reverse.5} parent=12 // loop_exit
          _
      $region13: #{reverse.5} parent=4 // pred_fallthru
        _
    $region5: #{reverse.5} parent=1 // pred_fallthru
      _
    %62 = vnop
    %s63 = scalar_lea.vmem [#allocation0], 7
    %v64 = vld [vmem:[%s63] ss:$-1 sm:$0xff]
    %v65 = vrot.slane %v64, 1
    %66 = vst [vmem:[#allocation1] sm:$0xff] %v65
    %s67 = scalar_lea.vmem [#allocation0], 8
    %s68 = scalar_lea.vmem %s67, 7 [#allocation0]
    %v69 = vld [vmem:[%s68] ss:$-1 sm:$0xff]
    %v70 = vrot.slane %v69, 1
    %v71 = vlaneseq
    %v72 = vshrl.u32 %v71, 7
    %vm73 = vcmp.lt.s32.totalorder %v72, 7
    %74 = vst.msk [vmem:[#allocation1] sm:$0xff] %vm73, %v70
    %s75 = scalar_lea.vmem [#allocation1], 8
    %s76 = scalar_lea.vmem [#allocation0], 16
    %s77 = scalar_lea.vmem %s76, 7 [#allocation0]
    %v78 = vld [vmem:[%s77] ss:$-1 sm:$0xff]
    %v79 = vrot.slane %v78, 1
    %80 = vst [vmem:[%s75] sm:$0xff] %v79
    %s81 = scalar_lea.vmem %s76, 8 [#allocation0]
    %s82 = scalar_lea.vmem %s81, 7 [#allocation0]
    %v83 = vld [vmem:[%s82] ss:$-1 sm:$0xff]
    %v84 = vrot.slane %v83, 1
    %v85 = vlaneseq
    %v86 = vshrl.u32 %v85, 7
    %vm87 = vcmp.lt.s32.totalorder %v86, 7
    %88 = vst.msk [vmem:[%s75] sm:$0xff] %vm87, %v84
    %s89 = scalar_lea.vmem [#allocation1], 16
    %s90 = scalar_lea.vmem [#allocation0], 32
    %s91 = scalar_lea.vmem %s90, 7 [#allocation0]
    %v92 = vld [vmem:[%s91] ss:$-1 sm:$0xff]
    %v93 = vrot.slane %v92, 1
    %94 = vst [vmem:[%s89] sm:$0xff] %v93
    %s95 = scalar_lea.vmem %s90, 8 [#allocation0]
    %s96 = scalar_lea.vmem %s95, 7 [#allocation0]
    %v97 = vld [vmem:[%s96] ss:$-1 sm:$0xff]
    %v98 = vrot.slane %v97, 1
    %v99 = vlaneseq
    %v100 = vshrl.u32 %v99, 7
    %vm101 = vcmp.lt.s32.totalorder %v100, 7
    %102 = vst.msk [vmem:[%s89] sm:$0xff] %vm101, %v98
    %s103 = scalar_lea.vmem [#allocation1], 24
    %s104 = scalar_lea.vmem [#allocation0], 48
    %s105 = scalar_lea.vmem %s104, 7 [#allocation0]
    %v106 = vld [vmem:[%s105] ss:$-1 sm:$0xff]
    %v107 = vrot.slane %v106, 1
    %108 = vst [vmem:[%s103] sm:$0xff] %v107
    %s109 = scalar_lea.vmem %s104, 8 [#allocation0]
    %s110 = scalar_lea.vmem %s109, 7 [#allocation0]
    %v111 = vld [vmem:[%s110] ss:$-1 sm:$0xff]
    %v112 = vrot.slane %v111, 1
    %v113 = vlaneseq
    %v114 = vshrl.u32 %v113, 7
    %vm115 = vcmp.lt.s32.totalorder %v114, 7
    %116 = vst.msk [vmem:[%s103] sm:$0xff] %vm115, %v112
    %s117 = scalar_lea.vmem [#allocation1], 32
    %s118 = scalar_lea.vmem [#allocation0], 64
    %s119 = scalar_lea.vmem %s118, 7 [#allocation0]
    %v120 = vld [vmem:[%s119] ss:$-1 sm:$0xff]
    %v121 = vrot.slane %v120, 1
    %122 = vst [vmem:[%s117] sm:$0xff] %v121
    %s123 = scalar_lea.vmem %s118, 8 [#allocation0]
    %s124 = scalar_lea.vmem %s123, 7 [#allocation0]
    %v125 = vld [vmem:[%s124] ss:$-1 sm:$0xff]
    %v126 = vrot.slane %v125, 1
    %v127 = vlaneseq
    %v128 = vshrl.u32 %v127, 7
    %vm129 = vcmp.lt.s32.totalorder %v128, 7
    %130 = vst.msk [vmem:[%s117] sm:$0xff] %vm129, %v126
    %s131 = scalar_lea.vmem [#allocation1], 40
    %s132 = scalar_lea.vmem [#allocation0], 80
    %s133 = scalar_lea.vmem %s132, 7 [#allocation0]
    %v134 = vld [vmem:[%s133] ss:$-1 sm:$0xff]
    %v135 = vrot.slane %v134, 1
    %136 = vst [vmem:[%s131] sm:$0xff] %v135
    %s137 = scalar_lea.vmem %s132, 8 [#allocation0]
    %s138 = scalar_lea.vmem %s137, 7 [#allocation0]
    %v139 = vld [vmem:[%s138] ss:$-1 sm:$0xff]
    %v140 = vrot.slane %v139, 1
    %v141 = vlaneseq
    %v142 = vshrl.u32 %v141, 7
    %vm143 = vcmp.lt.s32.totalorder %v142, 7
    %144 = vst.msk [vmem:[%s131] sm:$0xff] %vm143, %v140
    %s145 = scalar_lea.vmem [#allocation1], 48
    %s146 = scalar_lea.vmem [#allocation0], 96
    %s147 = scalar_lea.vmem %s146, 7 [#allocation0]
    %v148 = vld [vmem:[%s147] ss:$-1 sm:$0xff]
    %v149 = vrot.slane %v148, 1
    %150 = vst [vmem:[%s145] sm:$0xff] %v149
    %s151 = scalar_lea.vmem %s146, 8 [#allocation0]
    %s152 = scalar_lea.vmem %s151, 7 [#allocation0]
    %v153 = vld [vmem:[%s152] ss:$-1 sm:$0xff]
    %v154 = vrot.slane %v153, 1
    %v155 = vlaneseq
    %v156 = vshrl.u32 %v155, 7
    %vm157 = vcmp.lt.s32.totalorder %v156, 7
    %158 = vst.msk [vmem:[%s145] sm:$0xff] %vm157, %v154
    %s159 = scalar_lea.vmem [#allocation1], 56
    %s160 = scalar_lea.vmem [#allocation0], 112
    %s161 = scalar_lea.vmem %s160, 7 [#allocation0]
    %v162 = vld [vmem:[%s161] ss:$-1 sm:$0xff]
    %v163 = vrot.slane %v162, 1
    %164 = vst [vmem:[%s159] sm:$0xff] %v163
    %s165 = scalar_lea.vmem %s160, 8 [#allocation0]
    %s166 = scalar_lea.vmem %s165, 7 [#allocation0]
    %v167 = vld [vmem:[%s166] ss:$-1 sm:$0xff]
    %v168 = vrot.slane %v167, 1
    %v169 = vlaneseq
    %v170 = vshrl.u32 %v169, 7
    %vm171 = vcmp.lt.s32.totalorder %v170, 7
    %172 = vst.msk [vmem:[%s159] sm:$0xff] %vm171, %v168
    // Predicated region
    $region36: #{reverse.5} parent=1 // pred_check
      _
    $region37: #{reverse.5} parent=1 // pred_check_branch
      %174 = sbr.rel (0) target = $region39
    $region38: #{reverse.5} parent=1 // pred_region
      // Predicated region
      $region40: #{reverse.5} parent=38 // pred_check
        _
      $region41: #{reverse.5} parent=38 // pred_check_branch
        %176 = sbr.rel (0) target = $region43
      $region42: #{reverse.5} parent=38 // pred_region
        // Predicated region
        $region55: #{reverse.5} parent=42 // pred_check
          _
        $region56: #{reverse.5} parent=42 // pred_check_branch
          %205 = sbr.rel (0) target = $region58
        $region57: #{reverse.5} parent=42 // pred_region
          loop: start=0, step=1, limit=1
          $region59: #{reverse.5} parent=57 // loop_pre_header
            _
          $region60: #{reverse.5} parent=57 // loop_header
            %s207 = sphi 0, %s211
            %p208 = scmp.ge.s32.totalorder %s207, 1
            %s212 = sphi [#allocation1], [#allocation1]
            %s213 = sphi %s1, %s1
          $region61: #{reverse.5} parent=57 // loop_header_branch
            %210 = sbr.rel (%p208) target = $region65
          $region62: #{reverse.5} parent=57 // loop_body
            %v214 = vld [vmem:[%s212] sm:$0xff]
            %215 = vst [vmem:[%s213] sm:$0xff] %v214
            %v216 = vld [vmem:[%s212 + $0x8] sm:$0xff]
            %217 = vst [vmem:[%s213 + $0x8] sm:$0xff] %v216
            %v218 = vld [vmem:[%s212 + $0x10] sm:$0xff]
            %219 = vst [vmem:[%s213 + $0x10] sm:$0xff] %v218
            %v220 = vld [vmem:[%s212 + $0x18] sm:$0xff]
            %221 = vst [vmem:[%s213 + $0x18] sm:$0xff] %v220
            %v222 = vld [vmem:[%s212 + $0x20] sm:$0xff]
            %223 = vst [vmem:[%s213 + $0x20] sm:$0xff] %v222
            %v224 = vld [vmem:[%s212 + $0x28] sm:$0xff]
            %225 = vst [vmem:[%s213 + $0x28] sm:$0xff] %v224
            %v226 = vld [vmem:[%s212 + $0x30] sm:$0xff]
            %227 = vst [vmem:[%s213 + $0x30] sm:$0xff] %v226
            %v228 = vld [vmem:[%s212 + $0x38] sm:$0xff]
            %229 = vst [vmem:[%s213 + $0x38] sm:$0xff] %v228
          $region63: #{reverse.5} parent=57 // loop_footer
            %s211 = sadd.s32 1, %s207
          $region64: #{reverse.5} parent=57 // loop_footer_branch
            %206 = sbr.rel target = $region60
          $region65: #{reverse.5} parent=57 // loop_exit
            _
        $region58: #{reverse.5} parent=42 // pred_fallthru
          _
        // Predicated region
        $region66: #{reverse.5} parent=42 // pred_check
          _
        $region67: #{reverse.5} parent=42 // pred_check_branch
          %231 = sbr.rel target = $region69
        $region68: #{reverse.5} parent=42 // pred_region
          _
        $region69: #{reverse.5} parent=42 // pred_fallthru
          _
      $region43: #{reverse.5} parent=38 // pred_fallthru
        _
      // Predicated region
      $region44: #{reverse.5} parent=38 // pred_check
        _
      $region45: #{reverse.5} parent=38 // pred_check_branch
        %178 = sbr.rel target = $region47
      $region46: #{reverse.5} parent=38 // pred_region
        loop: start=0, step=1, limit=1
        $region48: #{reverse.5} parent=46 // loop_pre_header
          _
        $region49: #{reverse.5} parent=46 // loop_header
          %s181 = sphi 0, %s185
          %p182 = scmp.ge.s32.totalorder %s181, 1
          %s186 = sphi [#allocation1], [#allocation1]
          %s187 = sphi %s1, %s1
        $region50: #{reverse.5} parent=46 // loop_header_branch
          %184 = sbr.rel (%p182) target = $region54
        $region51: #{reverse.5} parent=46 // loop_body
          %v188 = vld [vmem:[%s186] sm:$0xff]
          %189 = vst [vmem:[%s187] sm:$0xff] %v188
          %v190 = vld [vmem:[%s186 + $0x8] sm:$0xff]
          %191 = vst [vmem:[%s187 + $0x8] sm:$0xff] %v190
          %v192 = vld [vmem:[%s186 + $0x10] sm:$0xff]
          %193 = vst [vmem:[%s187 + $0x10] sm:$0xff] %v192
          %v194 = vld [vmem:[%s186 + $0x18] sm:$0xff]
          %195 = vst [vmem:[%s187 + $0x18] sm:$0xff] %v194
          %v196 = vld [vmem:[%s186 + $0x20] sm:$0xff]
          %197 = vst [vmem:[%s187 + $0x20] sm:$0xff] %v196
          %v198 = vld [vmem:[%s186 + $0x28] sm:$0xff]
          %199 = vst [vmem:[%s187 + $0x28] sm:$0xff] %v198
          %v200 = vld [vmem:[%s186 + $0x30] sm:$0xff]
          %201 = vst [vmem:[%s187 + $0x30] sm:$0xff] %v200
          %v202 = vld [vmem:[%s186 + $0x38] sm:$0xff]
          %203 = vst [vmem:[%s187 + $0x38] sm:$0xff] %v202
        $region52: #{reverse.5} parent=46 // loop_footer
          %s185 = sadd.s32 1, %s181
        $region53: #{reverse.5} parent=46 // loop_footer_branch
          %180 = sbr.rel target = $region49
        $region54: #{reverse.5} parent=46 // loop_exit
          _
      $region47: #{reverse.5} parent=38 // pred_fallthru
        _
    $region39: #{reverse.5} parent=1 // pred_fallthru
      _
    %232 = vnop

// kernel: fourier_basic_block.4
$region0: #{fourier_basic_block.4}
  #allocation0 [shape = 'u32[]', space=smem, size = 0x4, offset = 0x4, fixed_abs, tag = 'smem constant byte address 0x4 - core index']
  #allocation1 [shape = 'u32[144,128]{1,0:T(1,128)}', space=vmem, size = 0x12000, scoped, tag = 'internal scratch']
  %s0 = inlined_call_operand.vmem [shape: bf16[32,4,4], index: 0, kind: input, shape index: {}]
  %s1 = inlined_call_operand.vmem [shape: bf16[32,4,8], index: 1, kind: input, shape index: {}]
  %s2 = inlined_call_operand.vmem [shape: f32[32,2,4], index: 2, kind: output, shape index: {0}]
  %s3 = inlined_call_operand.vmem [shape: f32[32,2,4], index: 3, kind: output, shape index: {1}]
  %4 = xla_tuple %s2, %s3
  %s5 = sld [smem:[#allocation0]]
  $region49: #{fourier_basic_block.4} parent=0
    _
  %s7 = ssub.s32 1, %s5
  %s8 = scalar_select 0, %s7, %s5
  loop: start=0, step=1, limit=4
  $region2: #{fourier_basic_block.4} parent=0 // loop_pre_header
    _
  $region3: #{fourier_basic_block.4} parent=0 // loop_header
    %s10 = sphi 0, %s14
    %p11 = scmp.ge.s32.totalorder %s10, 4
    %s20 = sphi 0, %s22
    %s23 = sphi 0, %s20
    %s24 = sphi 0, %s23
    %s40 = sphi 0, %s24
    %s46 = sphi 0, %s48
    %s49 = sphi 0, %s46
    %s50 = sphi 0, %s49
    %s66 = sphi 0, %s50
    %s72 = sphi 0, %s74
    %s75 = sphi 0, %s72
    %s76 = sphi 0, %s75
    %s92 = sphi 0, %s76
    %s98 = sphi 0, %s100
    %s101 = sphi 0, %s98
    %s102 = sphi 0, %s101
    %s118 = sphi 0, %s102
  $region4: #{fourier_basic_block.4} parent=0 // loop_header_branch
    %13 = sbr.rel (%p11) target = $region8
  $region5: #{fourier_basic_block.4} parent=0 // loop_body
    %s15 = ssub.s32 %s10, 1
    %s16 = ssub.s32 %s10, 2
    %s17 = sadd.s32 %s10, 1
    %s18 = ssub.s32 %s10, %s17
    %p19 = scmp.eq.s32.totalorder %s18, 0
    %s21 = sadd.s32 %s20, 1
    %s22 = scalar_select %p19, %s20, %s21
    %p25 = pneg %p19
    %p26 = scmp.eq.s32.totalorder %s10, 1
    %p27 = por %p25, %p26
    %p28 = scmp.ne.s32.totalorder %s20, %s23
    %p29 = scmp.eq.s32.totalorder %s10, 0
    %p30 = por %p28, %p29
    %p31 = scmp.ne.s32.totalorder %s20, %s23
    %p32 = scmp.eq.s32.totalorder %s15, 1
    %p33 = por %p31, %p32
    %p34 = scmp.ne.s32.totalorder %s23, %s24
    %p35 = scmp.eq.s32.totalorder %s15, 0
    %p36 = por %p34, %p35
    %p37 = scmp.ne.s32.totalorder %s23, %s24
    %p38 = scmp.eq.s32.totalorder %s16, 1
    %p39 = por %p37, %p38
    %p41 = scmp.ne.s32.totalorder %s24, %s40
    %p42 = scmp.eq.s32.totalorder %s16, 0
    %p43 = por %p41, %p42
    %s44 = ssub.s32 %s10, %s17
    %p45 = scmp.eq.s32.totalorder %s44, 0
    %s47 = sadd.s32 %s46, 1
    %s48 = scalar_select %p45, %s46, %s47
    %p51 = pneg %p45
    %p52 = scmp.eq.s32.totalorder %s10, 1
    %p53 = por %p51, %p52
    %p54 = scmp.ne.s32.totalorder %s46, %s49
    %p55 = scmp.eq.s32.totalorder %s10, 0
    %p56 = por %p54, %p55
    %p57 = scmp.ne.s32.totalorder %s46, %s49
    %p58 = scmp.eq.s32.totalorder %s15, 1
    %p59 = por %p57, %p58
    %p60 = scmp.ne.s32.totalorder %s49, %s50
    %p61 = scmp.eq.s32.totalorder %s15, 0
    %p62 = por %p60, %p61
    %p63 = scmp.ne.s32.totalorder %s49, %s50
    %p64 = scmp.eq.s32.totalorder %s16, 1
    %p65 = por %p63, %p64
    %p67 = scmp.ne.s32.totalorder %s50, %s66
    %p68 = scmp.eq.s32.totalorder %s16, 0
    %p69 = por %p67, %p68
    %s70 = ssub.s32 %s10, %s17
    %p71 = scmp.eq.s32.totalorder %s70, 0
    %s73 = sadd.s32 %s72, 1
    %s74 = scalar_select %p71, %s72, %s73
    %p77 = pneg %p71
    %p78 = scmp.eq.s32.totalorder %s10, 1
    %p79 = por %p77, %p78
    %p80 = scmp.ne.s32.totalorder %s72, %s75
    %p81 = scmp.eq.s32.totalorder %s10, 0
    %p82 = por %p80, %p81
    %p83 = scmp.ne.s32.totalorder %s72, %s75
    %p84 = scmp.eq.s32.totalorder %s15, 1
    %p85 = por %p83, %p84
    %p86 = scmp.ne.s32.totalorder %s75, %s76
    %p87 = scmp.eq.s32.totalorder %s15, 0
    %p88 = por %p86, %p87
    %p89 = scmp.ne.s32.totalorder %s75, %s76
    %p90 = scmp.eq.s32.totalorder %s16, 1
    %p91 = por %p89, %p90
    %p93 = scmp.ne.s32.totalorder %s76, %s92
    %p94 = scmp.eq.s32.totalorder %s16, 0
    %p95 = por %p93, %p94
    %s96 = ssub.s32 %s10, %s17
    %p97 = scmp.eq.s32.totalorder %s96, 0
    %s99 = sadd.s32 %s98, 1
    %s100 = scalar_select %p97, %s98, %s99
    %p103 = pneg %p97
    %p104 = scmp.eq.s32.totalorder %s10, 1
    %p105 = por %p103, %p104
    %p106 = scmp.ne.s32.totalorder %s98, %s101
    %p107 = scmp.eq.s32.totalorder %s10, 0
    %p108 = por %p106, %p107
    %p109 = scmp.ne.s32.totalorder %s98, %s101
    %p110 = scmp.eq.s32.totalorder %s15, 1
    %p111 = por %p109, %p110
    %p112 = scmp.ne.s32.totalorder %s101, %s102
    %p113 = scmp.eq.s32.totalorder %s15, 0
    %p114 = por %p112, %p113
    %p115 = scmp.ne.s32.totalorder %s101, %s102
    %p116 = scmp.eq.s32.totalorder %s16, 1
    %p117 = por %p115, %p116
    %p119 = scmp.ne.s32.totalorder %s102, %s118
    %p120 = scmp.eq.s32.totalorder %s16, 0
    %p121 = por %p119, %p120
    %p122 = scmp.le.s32.totalorder 1, %s10
    %p123 = scmp.lt.s32.totalorder %s10, 3
    %p124 = pnand %p122, %p123
    %p125 = pneg %p124
    // Predicated region
    $region9: #{fourier_basic_block.4} parent=5 // pred_check
      _
    $region10: #{fourier_basic_block.4} parent=5 // pred_check_branch
      %127 = sbr.rel (%p124) target = $region12
    $region11: #{fourier_basic_block.4} parent=5 // pred_region
      %s128 = ssub.s32 %s10, 1
    $region12: #{fourier_basic_block.4} parent=5 // pred_fallthru
      _
    %p129 = scmp.lt.s32.totalorder %s10, 2
    // Predicated region
    $region13: #{fourier_basic_block.4} parent=5 // pred_check
      %p130 = pneg %p129
    $region14: #{fourier_basic_block.4} parent=5 // pred_check_branch
      %132 = sbr.rel (%p130) target = $region16
    $region15: #{fourier_basic_block.4} parent=5 // pred_region
      // Predicated region
      $region17: #{fourier_basic_block.4} parent=15 // pred_check
        %p133 = pneg %p30
      $region18: #{fourier_basic_block.4} parent=15 // pred_check_branch
        %135 = sbr.rel (%p133) target = $region20
      $region19: #{fourier_basic_block.4} parent=15 // pred_region
        %s136 = smul.u32 16, %s10
        %p137 = scmp.lt.s32.totalorder %s136, 31
        %s138 = scalar_select %p137, %s136, 31
        %s139 = smul.addr %s138, 2
        %s140 = scalar_lea.vmem %s0, %s139
        %s141 = smul.u32 16, %s10
      $region20: #{fourier_basic_block.4} parent=15 // pred_fallthru
        _
      // Predicated region
      $region21: #{fourier_basic_block.4} parent=15 // pred_check
        %p142 = pneg %p56
      $region22: #{fourier_basic_block.4} parent=15 // pred_check_branch
        %144 = sbr.rel (%p142) target = $region24
      $region23: #{fourier_basic_block.4} parent=15 // pred_region
        %s145 = smul.u32 16, %s10
        %p146 = scmp.lt.s32.totalorder %s145, 31
        %s147 = scalar_select %p146, %s145, 31
        %s148 = smul.addr %s147, 2
        %s149 = scalar_lea.vmem %s1, %s148
        %s150 = smul.u32 16, %s10
      $region24: #{fourier_basic_block.4} parent=15 // pred_fallthru
        _
    $region16: #{fourier_basic_block.4} parent=5 // pred_fallthru
      _
    %p151 = scmp.le.s32.totalorder 1, %s10
    %p152 = scmp.lt.s32.totalorder %s10, 3
    %p153 = pnand %p151, %p152
    %p154 = pneg %p153
    // Predicated region
    $region25: #{fourier_basic_block.4} parent=5 // pred_check
      _
    $region26: #{fourier_basic_block.4} parent=5 // pred_check_branch
      %156 = sbr.rel (%p153) target = $region28
    $region27: #{fourier_basic_block.4} parent=5 // pred_region
      %s157 = ssub.s32 %s10, 1
      %s158 = smul.u32 16, %s15
      %p159 = scmp.lt.s32.totalorder %s158, 31
      %s160 = scalar_select %p159, %s158, 31
      %s161 = smul.addr %s160, 2
      %s162 = scalar_lea.vmem %s0, %s161
      %p163 = pneg %p36
      %p164 = pneg %p33
      %s165 = smul.u32 16, %s15
      %p166 = scmp.lt.s32.totalorder %s165, 31
      %s167 = scalar_select %p166, %s165, 31
      %s168 = smul.addr %s167, 2
      %s169 = scalar_lea.vmem %s1, %s168
      %p170 = pneg %p62
      %p171 = pneg %p59
      %p172 = pneg %p88
      %p173 = pneg %p85
      %s174 = smul.u32 16, %s15
      %p175 = scmp.lt.s32.totalorder %s174, 31
      %s176 = scalar_select %p175, %s174, 31
      %s177 = smul.addr %s176, 2
      %s178 = scalar_lea.vmem %s2, %s177
      %p179 = pneg %p114
      %p180 = pneg %p111
      %s181 = smul.u32 16, %s15
      %p182 = scmp.lt.s32.totalorder %s181, 31
      %s183 = scalar_select %p182, %s181, 31
      %s184 = smul.addr %s183, 2
      %s185 = scalar_lea.vmem %s3, %s184
      %s186 = smul.u32 16, %s15
      %p187 = scmp.lt.s32.totalorder %s186, 31
      %s188 = scalar_select %p187, %s186, 31
      %s189 = smul.addr %s188, 2
      %s190 = scalar_lea.vmem %s0, %s189
      %s191 = smul.u32 16, %s15
      %s192 = smul.u32 16, %s15
      %p193 = scmp.lt.s32.totalorder %s192, 31
      %s194 = scalar_select %p193, %s192, 31
      %s195 = smul.addr %s194, 2
      %s196 = scalar_lea.vmem %s1, %s195
      %s197 = smul.u32 16, %s15
      %s198 = smul.u32 16, %s15
      %p199 = scmp.lt.s32.totalorder %s198, 31
      %s200 = scalar_select %p199, %s198, 31
      %s201 = smul.addr %s200, 2
      %s202 = scalar_lea.vmem %s2, %s201
      %s203 = smul.u32 16, %s15
      %s204 = smul.u32 16, %s15
      %p205 = scmp.lt.s32.totalorder %s204, 31
      %s206 = scalar_select %p205, %s204, 31
      %s207 = smul.addr %s206, 2
      %s208 = scalar_lea.vmem %s3, %s207
      %s209 = smul.u32 16, %s15
      %v211 = vld [vmem:[%s190] sm:$0x3]
      %v212 = vld [vmem:[%s190 + $0x2] sm:$0x3]
      %v213 = vld [vmem:[%s190 + $0x4] sm:$0x3]
      %v214 = vld [vmem:[%s190 + $0x6] sm:$0x3]
      %v215 = vld [vmem:[%s190 + $0x8] sm:$0x3]
      %v216 = vld [vmem:[%s190 + $0xa] sm:$0x3]
      %v217 = vld [vmem:[%s190 + $0xc] sm:$0x3]
      %v218 = vld [vmem:[%s190 + $0xe] sm:$0x3]
      %v219 = vld [vmem:[%s190 + $0x10] sm:$0x3]
      %v220 = vld [vmem:[%s190 + $0x12] sm:$0x3]
      %v221 = vld [vmem:[%s190 + $0x14] sm:$0x3]
      %v222 = vld [vmem:[%s190 + $0x16] sm:$0x3]
      %v223 = vld [vmem:[%s190 + $0x18] sm:$0x3]
      %v224 = vld [vmem:[%s190 + $0x1a] sm:$0x3]
      %v225 = vld [vmem:[%s190 + $0x1c] sm:$0x3]
      %v226 = vld [vmem:[%s190 + $0x1e] sm:$0x3]
      %v227 = vld [vmem:[%s196] sm:$0x3]
      %v228 = vld [vmem:[%s196 + $0x2] sm:$0x3]
      %v229 = vld [vmem:[%s196 + $0x4] sm:$0x3]
      %v230 = vld [vmem:[%s196 + $0x6] sm:$0x3]
      %v231 = vld [vmem:[%s196 + $0x8] sm:$0x3]
      %v232 = vld [vmem:[%s196 + $0xa] sm:$0x3]
      %v233 = vld [vmem:[%s196 + $0xc] sm:$0x3]
      %v234 = vld [vmem:[%s196 + $0xe] sm:$0x3]
      %v235 = vld [vmem:[%s196 + $0x10] sm:$0x3]
      %v236 = vld [vmem:[%s196 + $0x12] sm:$0x3]
      %v237 = vld [vmem:[%s196 + $0x14] sm:$0x3]
      %v238 = vld [vmem:[%s196 + $0x16] sm:$0x3]
      %v239 = vld [vmem:[%s196 + $0x18] sm:$0x3]
      %v240 = vld [vmem:[%s196 + $0x1a] sm:$0x3]
      %v241 = vld [vmem:[%s196 + $0x1c] sm:$0x3]
      %v242 = vld [vmem:[%s196 + $0x1e] sm:$0x3]
      %vm243 = vcmask 31744
      %v245 = vsel %vm243, %v211, 0
      %vm247 = vcmask 1041408
      %v249 = vsel %vm247, %v227, 0
      %251 = vmatprep.subr.bf16.mxu0 0
      %252 = vmatpush1.bf16.msra.mxu0 %v249
      %253 = vmatprep.subr.bf16.mxu0 0
      %254 = vmatpush1.bf16.msra.mxu0 0
      %255 = vmatprep.subr.bf16.mxu0 0
      %256 = vmatpush1.bf16.msra.mxu0 0
      %257 = vmatprep.subr.bf16.mxu0 0
      %258 = vmatpush1.bf16.msra.mxu0 0
      %259 = vmatprep.subr.bf16.mxu0 0
      %260 = vmatpush1.bf16.msra.mxu0 0
      %261 = vmatprep.subr.bf16.mxu0 0
      %262 = vmatpush1.bf16.msra.mxu0 0
      %263 = vmatprep.subr.bf16.mxu0 0
      %264 = vmatpush1.bf16.msra.mxu0 0
      %265 = vmatprep.subr.bf16.mxu0 0
      %266 = vmatpush1.bf16.msra.mxu0 0
      %267 = vmatprep.subr.bf16.mxu0 0
      %268 = vmatpush1.bf16.msra.mxu0 0
      %269 = vmatprep.subr.bf16.mxu0 0
      %270 = vmatpush1.bf16.msra.mxu0 0
      %271 = vmatprep.subr.bf16.mxu0 0
      %272 = vmatpush1.bf16.msra.mxu0 0
      %273 = vmatprep.subr.bf16.mxu0 0
      %274 = vmatpush1.bf16.msra.mxu0 0
      %275 = vmatprep.subr.bf16.mxu0 0
      %276 = vmatpush1.bf16.msra.mxu0 0
      %277 = vmatprep.subr.bf16.mxu0 0
      %278 = vmatpush1.bf16.msra.mxu0 0
      %279 = vmatprep.subr.bf16.mxu0 0
      %280 = vmatpush1.bf16.msra.mxu0 0
      %281 = vmatprep.subr.bf16.mxu0 0
      %282 = vmatpush1.bf16.msra.mxu0 0
      %283 = vmatprep.mubr.bf16.mxu0 0
      %284 = vmatmul.mubr.bf16.gmra.mrb[0].mxu0 %v245
      %v285 = vpop.f32.mrb[0].mxu0
      %v286 = vadd.f32 0.0, %v285
      %v287 = vpop.f32.mrb[0].mxu0
      %v288 = vpop.f32.mrb[0].mxu0
      %v289 = vpop.f32.mrb[0].mxu0
      %290 = vdwg.mxu0
      %v292 = vsel %vm243, %v212, 0
      %v295 = vsel %vm247, %v228, 0
      %297 = vmatprep.subr.bf16.mxu0 0
      %298 = vmatpush1.bf16.msra.mxu0 %v295
      %299 = vmatprep.subr.bf16.mxu0 0
      %300 = vmatpush1.bf16.msra.mxu0 0
      %301 = vmatprep.subr.bf16.mxu0 0
      %302 = vmatpush1.bf16.msra.mxu0 0
      %303 = vmatprep.subr.bf16.mxu0 0
      %304 = vmatpush1.bf16.msra.mxu0 0
      %305 = vmatprep.subr.bf16.mxu0 0
      %306 = vmatpush1.bf16.msra.mxu0 0
      %307 = vmatprep.subr.bf16.mxu0 0
      %308 = vmatpush1.bf16.msra.mxu0 0
      %309 = vmatprep.subr.bf16.mxu0 0
      %310 = vmatpush1.bf16.msra.mxu0 0
      %311 = vmatprep.subr.bf16.mxu0 0
      %312 = vmatpush1.bf16.msra.mxu0 0
      %313 = vmatprep.subr.bf16.mxu0 0
      %314 = vmatpush1.bf16.msra.mxu0 0
      %315 = vmatprep.subr.bf16.mxu0 0
      %316 = vmatpush1.bf16.msra.mxu0 0
      %317 = vmatprep.subr.bf16.mxu0 0
      %318 = vmatpush1.bf16.msra.mxu0 0
      %319 = vmatprep.subr.bf16.mxu0 0
      %320 = vmatpush1.bf16.msra.mxu0 0
      %321 = vmatprep.subr.bf16.mxu0 0
      %322 = vmatpush1.bf16.msra.mxu0 0
      %323 = vmatprep.subr.bf16.mxu0 0
      %324 = vmatpush1.bf16.msra.mxu0 0
      %325 = vmatprep.subr.bf16.mxu0 0
      %326 = vmatpush1.bf16.msra.mxu0 0
      %327 = vmatprep.subr.bf16.mxu0 0
      %328 = vmatpush1.bf16.msra.mxu0 0
      %329 = vmatprep.mubr.bf16.mxu0 0
      %330 = vmatmul.mubr.bf16.gmra.mrb[0].mxu0 %v292
      %v331 = vpop.f32.mrb[0].mxu0
      %v332 = vadd.f32 0.0, %v331
      %v333 = vpop.f32.mrb[0].mxu0
      %v334 = vpop.f32.mrb[0].mxu0
      %v335 = vpop.f32.mrb[0].mxu0
      %336 = vdwg.mxu0
      %v338 = vsel %vm243, %v213, 0
      %v341 = vsel %vm247, %v229, 0
      %343 = vmatprep.subr.bf16.mxu0 0
      %344 = vmatpush1.bf16.msra.mxu0 %v341
      %345 = vmatprep.subr.bf16.mxu0 0
      %346 = vmatpush1.bf16.msra.mxu0 0
      %347 = vmatprep.subr.bf16.mxu0 0
      %348 = vmatpush1.bf16.msra.mxu0 0
      %349 = vmatprep.subr.bf16.mxu0 0
      %350 = vmatpush1.bf16.msra.mxu0 0
      %351 = vmatprep.subr.bf16.mxu0 0
      %352 = vmatpush1.bf16.msra.mxu0 0
      %353 = vmatprep.subr.bf16.mxu0 0
      %354 = vmatpush1.bf16.msra.mxu0 0
      %355 = vmatprep.subr.bf16.mxu0 0
      %356 = vmatpush1.bf16.msra.mxu0 0
      %357 = vmatprep.subr.bf16.mxu0 0
      %358 = vmatpush1.bf16.msra.mxu0 0
      %359 = vmatprep.subr.bf16.mxu0 0
      %360 = vmatpush1.bf16.msra.mxu0 0
      %361 = vmatprep.subr.bf16.mxu0 0
      %362 = vmatpush1.bf16.msra.mxu0 0
      %363 = vmatprep.subr.bf16.mxu0 0
      %364 = vmatpush1.bf16.msra.mxu0 0
      %365 = vmatprep.subr.bf16.mxu0 0
      %366 = vmatpush1.bf16.msra.mxu0 0
      %367 = vmatprep.subr.bf16.mxu0 0
      %368 = vmatpush1.bf16.msra.mxu0 0
      %369 = vmatprep.subr.bf16.mxu0 0
      %370 = vmatpush1.bf16.msra.mxu0 0
      %371 = vmatprep.subr.bf16.mxu0 0
      %372 = vmatpush1.bf16.msra.mxu0 0
      %373 = vmatprep.subr.bf16.mxu0 0
      %374 = vmatpush1.bf16.msra.mxu0 0
      %375 = vmatprep.mubr.bf16.mxu0 0
      %376 = vmatmul.mubr.bf16.gmra.mrb[0].mxu0 %v338
      %v377 = vpop.f32.mrb[0].mxu0
      %v378 = vadd.f32 0.0, %v377
      %v379 = vpop.f32.mrb[0].mxu0
      %v380 = vpop.f32.mrb[0].mxu0
      %v381 = vpop.f32.mrb[0].mxu0
      %382 = vdwg.mxu0
      %v384 = vsel %vm243, %v214, 0
      %v387 = vsel %vm247, %v230, 0
      %389 = vmatprep.subr.bf16.mxu0 0
      %390 = vmatpush1.bf16.msra.mxu0 %v387
      %391 = vmatprep.subr.bf16.mxu0 0
      %392 = vmatpush1.bf16.msra.mxu0 0
      %393 = vmatprep.subr.bf16.mxu0 0
      %394 = vmatpush1.bf16.msra.mxu0 0
      %395 = vmatprep.subr.bf16.mxu0 0
      %396 = vmatpush1.bf16.msra.mxu0 0
      %397 = vmatprep.subr.bf16.mxu0 0
      %398 = vmatpush1.bf16.msra.mxu0 0
      %399 = vmatprep.subr.bf16.mxu0 0
      %400 = vmatpush1.bf16.msra.mxu0 0
      %401 = vmatprep.subr.bf16.mxu0 0
      %402 = vmatpush1.bf16.msra.mxu0 0
      %403 = vmatprep.subr.bf16.mxu0 0
      %404 = vmatpush1.bf16.msra.mxu0 0
      %405 = vmatprep.subr.bf16.mxu0 0
      %406 = vmatpush1.bf16.msra.mxu0 0
      %407 = vmatprep.subr.bf16.mxu0 0
      %408 = vmatpush1.bf16.msra.mxu0 0
      %409 = vmatprep.subr.bf16.mxu0 0
      %410 = vmatpush1.bf16.msra.mxu0 0
      %411 = vmatprep.subr.bf16.mxu0 0
      %412 = vmatpush1.bf16.msra.mxu0 0
      %413 = vmatprep.subr.bf16.mxu0 0
      %414 = vmatpush1.bf16.msra.mxu0 0
      %415 = vmatprep.subr.bf16.mxu0 0
      %416 = vmatpush1.bf16.msra.mxu0 0
      %417 = vmatprep.subr.bf16.mxu0 0
      %418 = vmatpush1.bf16.msra.mxu0 0
      %419 = vmatprep.subr.bf16.mxu0 0
      %420 = vmatpush1.bf16.msra.mxu0 0
      %421 = vmatprep.mubr.bf16.mxu0 0
      %422 = vmatmul.mubr.bf16.gmra.mrb[0].mxu0 %v384
      %v423 = vpop.f32.mrb[0].mxu0
      %v424 = vadd.f32 0.0, %v423
      %v425 = vpop.f32.mrb[0].mxu0
      %v426 = vpop.f32.mrb[0].mxu0
      %v427 = vpop.f32.mrb[0].mxu0
      %428 = vdwg.mxu0
      %v430 = vsel %vm243, %v215, 0
      %v433 = vsel %vm247, %v231, 0
      %435 = vmatprep.subr.bf16.mxu0 0
      %436 = vmatpush1.bf16.msra.mxu0 %v433
      %437 = vmatprep.subr.bf16.mxu0 0
      %438 = vmatpush1.bf16.msra.mxu0 0
      %439 = vmatprep.subr.bf16.mxu0 0
      %440 = vmatpush1.bf16.msra.mxu0 0
      %441 = vmatprep.subr.bf16.mxu0 0
      %442 = vmatpush1.bf16.msra.mxu0 0
      %443 = vmatprep.subr.bf16.mxu0 0
      %444 = vmatpush1.bf16.msra.mxu0 0
      %445 = vmatprep.subr.bf16.mxu0 0
      %446 = vmatpush1.bf16.msra.mxu0 0
      %447 = vmatprep.subr.bf16.mxu0 0
      %448 = vmatpush1.bf16.msra.mxu0 0
      %449 = vmatprep.subr.bf16.mxu0 0
      %450 = vmatpush1.bf16.msra.mxu0 0
      %451 = vmatprep.subr.bf16.mxu0 0
      %452 = vmatpush1.bf16.msra.mxu0 0
      %453 = vmatprep.subr.bf16.mxu0 0
      %454 = vmatpush1.bf16.msra.mxu0 0
      %455 = vmatprep.subr.bf16.mxu0 0
      %456 = vmatpush1.bf16.msra.mxu0 0
      %457 = vmatprep.subr.bf16.mxu0 0
      %458 = vmatpush1.bf16.msra.mxu0 0
      %459 = vmatprep.subr.bf16.mxu0 0
      %460 = vmatpush1.bf16.msra.mxu0 0
      %461 = vmatprep.subr.bf16.mxu0 0
      %462 = vmatpush1.bf16.msra.mxu0 0
      %463 = vmatprep.subr.bf16.mxu0 0
      %464 = vmatpush1.bf16.msra.mxu0 0
      %465 = vmatprep.subr.bf16.mxu0 0
      %466 = vmatpush1.bf16.msra.mxu0 0
      %467 = vmatprep.mubr.bf16.mxu0 0
      %468 = vmatmul.mubr.bf16.gmra.mrb[0].mxu0 %v430
      %v469 = vpop.f32.mrb[0].mxu0
      %v470 = vadd.f32 0.0, %v469
      %v471 = vpop.f32.mrb[0].mxu0
      %v472 = vpop.f32.mrb[0].mxu0
      %v473 = vpop.f32.mrb[0].mxu0
      %474 = vdwg.mxu0
      %v476 = vsel %vm243, %v216, 0
      %v479 = vsel %vm247, %v232, 0
      %481 = vmatprep.subr.bf16.mxu0 0
      %482 = vmatpush1.bf16.msra.mxu0 %v479
      %483 = vmatprep.subr.bf16.mxu0 0
      %484 = vmatpush1.bf16.msra.mxu0 0
      %485 = vmatprep.subr.bf16.mxu0 0
      %486 = vmatpush1.bf16.msra.mxu0 0
      %487 = vmatprep.subr.bf16.mxu0 0
      %488 = vmatpush1.bf16.msra.mxu0 0
      %489 = vmatprep.subr.bf16.mxu0 0
      %490 = vmatpush1.bf16.msra.mxu0 0
      %491 = vmatprep.subr.bf16.mxu0 0
      %492 = vmatpush1.bf16.msra.mxu0 0
      %493 = vmatprep.subr.bf16.mxu0 0
      %494 = vmatpush1.bf16.msra.mxu0 0
      %495 = vmatprep.subr.bf16.mxu0 0
      %496 = vmatpush1.bf16.msra.mxu0 0
      %497 = vmatprep.subr.bf16.mxu0 0
      %498 = vmatpush1.bf16.msra.mxu0 0
      %499 = vmatprep.subr.bf16.mxu0 0
      %500 = vmatpush1.bf16.msra.mxu0 0
      %501 = vmatprep.subr.bf16.mxu0 0
      %502 = vmatpush1.bf16.msra.mxu0 0
      %503 = vmatprep.subr.bf16.mxu0 0
      %504 = vmatpush1.bf16.msra.mxu0 0
      %505 = vmatprep.subr.bf16.mxu0 0
      %506 = vmatpush1.bf16.msra.mxu0 0
      %507 = vmatprep.subr.bf16.mxu0 0
      %508 = vmatpush1.bf16.msra.mxu0 0
      %509 = vmatprep.subr.bf16.mxu0 0
      %510 = vmatpush1.bf16.msra.mxu0 0
      %511 = vmatprep.subr.bf16.mxu0 0
      %512 = vmatpush1.bf16.msra.mxu0 0
      %513 = vmatprep.mubr.bf16.mxu0 0
      %514 = vmatmul.mubr.bf16.gmra.mrb[0].mxu0 %v476
      %v515 = vpop.f32.mrb[0].mxu0
      %v516 = vadd.f32 0.0, %v515
      %v517 = vpop.f32.mrb[0].mxu0
      %v518 = vpop.f32.mrb[0].mxu0
      %v519 = vpop.f32.mrb[0].mxu0
      %520 = vdwg.mxu0
      %v522 = vsel %vm243, %v217, 0
      %v525 = vsel %vm247, %v233, 0
      %527 = vmatprep.subr.bf16.mxu0 0
      %528 = vmatpush1.bf16.msra.mxu0 %v525
      %529 = vmatprep.subr.bf16.mxu0 0
      %530 = vmatpush1.bf16.msra.mxu0 0
      %531 = vmatprep.subr.bf16.mxu0 0
      %532 = vmatpush1.bf16.msra.mxu0 0
      %533 = vmatprep.subr.bf16.mxu0 0
      %534 = vmatpush1.bf16.msra.mxu0 0
      %535 = vmatprep.subr.bf16.mxu0 0
      %536 = vmatpush1.bf16.msra.mxu0 0
      %537 = vmatprep.subr.bf16.mxu0 0
      %538 = vmatpush1.bf16.msra.mxu0 0
      %539 = vmatprep.subr.bf16.mxu0 0
      %540 = vmatpush1.bf16.msra.mxu0 0
      %541 = vmatprep.subr.bf16.mxu0 0
      %542 = vmatpush1.bf16.msra.mxu0 0
      %543 = vmatprep.subr.bf16.mxu0 0
      %544 = vmatpush1.bf16.msra.mxu0 0
      %545 = vmatprep.subr.bf16.mxu0 0
      %546 = vmatpush1.bf16.msra.mxu0 0
      %547 = vmatprep.subr.bf16.mxu0 0
      %548 = vmatpush1.bf16.msra.mxu0 0
      %549 = vmatprep.subr.bf16.mxu0 0
      %550 = vmatpush1.bf16.msra.mxu0 0
      %551 = vmatprep.subr.bf16.mxu0 0
      %552 = vmatpush1.bf16.msra.mxu0 0
      %553 = vmatprep.subr.bf16.mxu0 0
      %554 = vmatpush1.bf16.msra.mxu0 0
      %555 = vmatprep.subr.bf16.mxu0 0
      %556 = vmatpush1.bf16.msra.mxu0 0
      %557 = vmatprep.subr.bf16.mxu0 0
      %558 = vmatpush1.bf16.msra.mxu0 0
      %559 = vmatprep.mubr.bf16.mxu0 0
      %560 = vmatmul.mubr.bf16.gmra.mrb[0].mxu0 %v522
      %v561 = vpop.f32.mrb[0].mxu0
      %v562 = vadd.f32 0.0, %v561
      %v563 = vpop.f32.mrb[0].mxu0
      %v564 = vpop.f32.mrb[0].mxu0
      %v565 = vpop.f32.mrb[0].mxu0
      %566 = vdwg.mxu0
      %v568 = vsel %vm243, %v218, 0
      %v571 = vsel %vm247, %v234, 0
      %573 = vmatprep.subr.bf16.mxu0 0
      %574 = vmatpush1.bf16.msra.mxu0 %v571
      %575 = vmatprep.subr.bf16.mxu0 0
      %576 = vmatpush1.bf16.msra.mxu0 0
      %577 = vmatprep.subr.bf16.mxu0 0
      %578 = vmatpush1.bf16.msra.mxu0 0
      %579 = vmatprep.subr.bf16.mxu0 0
      %580 = vmatpush1.bf16.msra.mxu0 0
      %581 = vmatprep.subr.bf16.mxu0 0
      %582 = vmatpush1.bf16.msra.mxu0 0
      %583 = vmatprep.subr.bf16.mxu0 0
      %584 = vmatpush1.bf16.msra.mxu0 0
      %585 = vmatprep.subr.bf16.mxu0 0
      %586 = vmatpush1.bf16.msra.mxu0 0
      %587 = vmatprep.subr.bf16.mxu0 0
      %588 = vmatpush1.bf16.msra.mxu0 0
      %589 = vmatprep.subr.bf16.mxu0 0
      %590 = vmatpush1.bf16.msra.mxu0 0
      %591 = vmatprep.subr.bf16.mxu0 0
      %592 = vmatpush1.bf16.msra.mxu0 0
      %593 = vmatprep.subr.bf16.mxu0 0
      %594 = vmatpush1.bf16.msra.mxu0 0
      %595 = vmatprep.subr.bf16.mxu0 0
      %596 = vmatpush1.bf16.msra.mxu0 0
      %597 = vmatprep.subr.bf16.mxu0 0
      %598 = vmatpush1.bf16.msra.mxu0 0
      %599 = vmatprep.subr.bf16.mxu0 0
      %600 = vmatpush1.bf16.msra.mxu0 0
      %601 = vmatprep.subr.bf16.mxu0 0
      %602 = vmatpush1.bf16.msra.mxu0 0
      %603 = vmatprep.subr.bf16.mxu0 0
      %604 = vmatpush1.bf16.msra.mxu0 0
      %605 = vmatprep.mubr.bf16.mxu0 0
      %606 = vmatmul.mubr.bf16.gmra.mrb[0].mxu0 %v568
      %v607 = vpop.f32.mrb[0].mxu0
      %v608 = vadd.f32 0.0, %v607
      %v609 = vpop.f32.mrb[0].mxu0
      %v610 = vpop.f32.mrb[0].mxu0
      %v611 = vpop.f32.mrb[0].mxu0
      %612 = vdwg.mxu0
      %v614 = vsel %vm243, %v219, 0
      %v617 = vsel %vm247, %v235, 0
      %619 = vmatprep.subr.bf16.mxu0 0
      %620 = vmatpush1.bf16.msra.mxu0 %v617
      %621 = vmatprep.subr.bf16.mxu0 0
      %622 = vmatpush1.bf16.msra.mxu0 0
      %623 = vmatprep.subr.bf16.mxu0 0
      %624 = vmatpush1.bf16.msra.mxu0 0
      %625 = vmatprep.subr.bf16.mxu0 0
      %626 = vmatpush1.bf16.msra.mxu0 0
      %627 = vmatprep.subr.bf16.mxu0 0
      %628 = vmatpush1.bf16.msra.mxu0 0
      %629 = vmatprep.subr.bf16.mxu0 0
      %630 = vmatpush1.bf16.msra.mxu0 0
      %631 = vmatprep.subr.bf16.mxu0 0
      %632 = vmatpush1.bf16.msra.mxu0 0
      %633 = vmatprep.subr.bf16.mxu0 0
      %634 = vmatpush1.bf16.msra.mxu0 0
      %635 = vmatprep.subr.bf16.mxu0 0
      %636 = vmatpush1.bf16.msra.mxu0 0
      %637 = vmatprep.subr.bf16.mxu0 0
      %638 = vmatpush1.bf16.msra.mxu0 0
      %639 = vmatprep.subr.bf16.mxu0 0
      %640 = vmatpush1.bf16.msra.mxu0 0
      %641 = vmatprep.subr.bf16.mxu0 0
      %642 = vmatpush1.bf16.msra.mxu0 0
      %643 = vmatprep.subr.bf16.mxu0 0
      %644 = vmatpush1.bf16.msra.mxu0 0
      %645 = vmatprep.subr.bf16.mxu0 0
      %646 = vmatpush1.bf16.msra.mxu0 0
      %647 = vmatprep.subr.bf16.mxu0 0
      %648 = vmatpush1.bf16.msra.mxu0 0
      %649 = vmatprep.subr.bf16.mxu0 0
      %650 = vmatpush1.bf16.msra.mxu0 0
      %651 = vmatprep.mubr.bf16.mxu0 0
      %652 = vmatmul.mubr.bf16.gmra.mrb[0].mxu0 %v614
      %v653 = vpop.f32.mrb[0].mxu0
      %v654 = vadd.f32 0.0, %v653
      %v655 = vpop.f32.mrb[0].mxu0
      %v656 = vpop.f32.mrb[0].mxu0
      %v657 = vpop.f32.mrb[0].mxu0
      %658 = vdwg.mxu0
      %v660 = vsel %vm243, %v220, 0
      %v663 = vsel %vm247, %v236, 0
      %665 = vmatprep.subr.bf16.mxu0 0
      %666 = vmatpush1.bf16.msra.mxu0 %v663
      %667 = vmatprep.subr.bf16.mxu0 0
      %668 = vmatpush1.bf16.msra.mxu0 0
      %669 = vmatprep.subr.bf16.mxu0 0
      %670 = vmatpush1.bf16.msra.mxu0 0
      %671 = vmatprep.subr.bf16.mxu0 0
      %672 = vmatpush1.bf16.msra.mxu0 0
      %673 = vmatprep.subr.bf16.mxu0 0
      %674 = vmatpush1.bf16.msra.mxu0 0
      %675 = vmatprep.subr.bf16.mxu0 0
      %676 = vmatpush1.bf16.msra.mxu0 0
      %677 = vmatprep.subr.bf16.mxu0 0
      %678 = vmatpush1.bf16.msra.mxu0 0
      %679 = vmatprep.subr.bf16.mxu0 0
      %680 = vmatpush1.bf16.msra.mxu0 0
      %681 = vmatprep.subr.bf16.mxu0 0
      %682 = vmatpush1.bf16.msra.mxu0 0
      %683 = vmatprep.subr.bf16.mxu0 0
      %684 = vmatpush1.bf16.msra.mxu0 0
      %685 = vmatprep.subr.bf16.mxu0 0
      %686 = vmatpush1.bf16.msra.mxu0 0
      %687 = vmatprep.subr.bf16.mxu0 0
      %688 = vmatpush1.bf16.msra.mxu0 0
      %689 = vmatprep.subr.bf16.mxu0 0
      %690 = vmatpush1.bf16.msra.mxu0 0
      %691 = vmatprep.subr.bf16.mxu0 0
      %692 = vmatpush1.bf16.msra.mxu0 0
      %693 = vmatprep.subr.bf16.mxu0 0
      %694 = vmatpush1.bf16.msra.mxu0 0
      %695 = vmatprep.subr.bf16.mxu0 0
      %696 = vmatpush1.bf16.msra.mxu0 0
      %697 = vmatprep.mubr.bf16.mxu0 0
      %698 = vmatmul.mubr.bf16.gmra.mrb[0].mxu0 %v660
      %v699 = vpop.f32.mrb[0].mxu0
      %v700 = vadd.f32 0.0, %v699
      %v701 = vpop.f32.mrb[0].mxu0
      %v702 = vpop.f32.mrb[0].mxu0
      %v703 = vpop.f32.mrb[0].mxu0
      %704 = vdwg.mxu0
      %v706 = vsel %vm243, %v221, 0
      %v709 = vsel %vm247, %v237, 0
      %711 = vmatprep.subr.bf16.mxu0 0
      %712 = vmatpush1.bf16.msra.mxu0 %v709
      %713 = vmatprep.subr.bf16.mxu0 0
      %714 = vmatpush1.bf16.msra.mxu0 0
      %715 = vmatprep.subr.bf16.mxu0 0
      %716 = vmatpush1.bf16.msra.mxu0 0
      %717 = vmatprep.subr.bf16.mxu0 0
      %718 = vmatpush1.bf16.msra.mxu0 0
      %719 = vmatprep.subr.bf16.mxu0 0
      %720 = vmatpush1.bf16.msra.mxu0 0
      %721 = vmatprep.subr.bf16.mxu0 0
      %722 = vmatpush1.bf16.msra.mxu0 0
      %723 = vmatprep.subr.bf16.mxu0 0
      %724 = vmatpush1.bf16.msra.mxu0 0
      %725 = vmatprep.subr.bf16.mxu0 0
      %726 = vmatpush1.bf16.msra.mxu0 0
      %727 = vmatprep.subr.bf16.mxu0 0
      %728 = vmatpush1.bf16.msra.mxu0 0
      %729 = vmatprep.subr.bf16.mxu0 0
      %730 = vmatpush1.bf16.msra.mxu0 0
      %731 = vmatprep.subr.bf16.mxu0 0
      %732 = vmatpush1.bf16.msra.mxu0 0
      %733 = vmatprep.subr.bf16.mxu0 0
      %734 = vmatpush1.bf16.msra.mxu0 0
      %735 = vmatprep.subr.bf16.mxu0 0
      %736 = vmatpush1.bf16.msra.mxu0 0
      %737 = vmatprep.subr.bf16.mxu0 0
      %738 = vmatpush1.bf16.msra.mxu0 0
      %739 = vmatprep.subr.bf16.mxu0 0
      %740 = vmatpush1.bf16.msra.mxu0 0
      %741 = vmatprep.subr.bf16.mxu0 0
      %742 = vmatpush1.bf16.msra.mxu0 0
      %743 = vmatprep.mubr.bf16.mxu0 0
      %744 = vmatmul.mubr.bf16.gmra.mrb[0].mxu0 %v706
      %v745 = vpop.f32.mrb[0].mxu0
      %v746 = vadd.f32 0.0, %v745
      %v747 = vpop.f32.mrb[0].mxu0
      %v748 = vpop.f32.mrb[0].mxu0
      %v749 = vpop.f32.mrb[0].mxu0
      %750 = vdwg.mxu0
      %v752 = vsel %vm243, %v222, 0
      %v755 = vsel %vm247, %v238, 0
      %757 = vmatprep.subr.bf16.mxu0 0
      %758 = vmatpush1.bf16.msra.mxu0 %v755
      %759 = vmatprep.subr.bf16.mxu0 0
      %760 = vmatpush1.bf16.msra.mxu0 0
      %761 = vmatprep.subr.bf16.mxu0 0
      %762 = vmatpush1.bf16.msra.mxu0 0
      %763 = vmatprep.subr.bf16.mxu0 0
      %764 = vmatpush1.bf16.msra.mxu0 0
      %765 = vmatprep.subr.bf16.mxu0 0
      %766 = vmatpush1.bf16.msra.mxu0 0
      %767 = vmatprep.subr.bf16.mxu0 0
      %768 = vmatpush1.bf16.msra.mxu0 0
      %769 = vmatprep.subr.bf16.mxu0 0
      %770 = vmatpush1.bf16.msra.mxu0 0
      %771 = vmatprep.subr.bf16.mxu0 0
      %772 = vmatpush1.bf16.msra.mxu0 0
      %773 = vmatprep.subr.bf16.mxu0 0
      %774 = vmatpush1.bf16.msra.mxu0 0
      %775 = vmatprep.subr.bf16.mxu0 0
      %776 = vmatpush1.bf16.msra.mxu0 0
      %777 = vmatprep.subr.bf16.mxu0 0
      %778 = vmatpush1.bf16.msra.mxu0 0
      %779 = vmatprep.subr.bf16.mxu0 0
      %780 = vmatpush1.bf16.msra.mxu0 0
      %781 = vmatprep.subr.bf16.mxu0 0
      %782 = vmatpush1.bf16.msra.mxu0 0
      %783 = vmatprep.subr.bf16.mxu0 0
      %784 = vmatpush1.bf16.msra.mxu0 0
      %785 = vmatprep.subr.bf16.mxu0 0
      %786 = vmatpush1.bf16.msra.mxu0 0
      %787 = vmatprep.subr.bf16.mxu0 0
      %788 = vmatpush1.bf16.msra.mxu0 0
      %789 = vmatprep.mubr.bf16.mxu0 0
      %790 = vmatmul.mubr.bf16.gmra.mrb[0].mxu0 %v752
      %v791 = vpop.f32.mrb[0].mxu0
      %v792 = vadd.f32 0.0, %v791
      %v793 = vpop.f32.mrb[0].mxu0
      %v794 = vpop.f32.mrb[0].mxu0
      %v795 = vpop.f32.mrb[0].mxu0
      %796 = vdwg.mxu0
      %v798 = vsel %vm243, %v223, 0
      %v801 = vsel %vm247, %v239, 0
      %803 = vmatprep.subr.bf16.mxu0 0
      %804 = vmatpush1.bf16.msra.mxu0 %v801
      %805 = vmatprep.subr.bf16.mxu0 0
      %806 = vmatpush1.bf16.msra.mxu0 0
      %807 = vmatprep.subr.bf16.mxu0 0
      %808 = vmatpush1.bf16.msra.mxu0 0
      %809 = vmatprep.subr.bf16.mxu0 0
      %810 = vmatpush1.bf16.msra.mxu0 0
      %811 = vmatprep.subr.bf16.mxu0 0
      %812 = vmatpush1.bf16.msra.mxu0 0
      %813 = vmatprep.subr.bf16.mxu0 0
      %814 = vmatpush1.bf16.msra.mxu0 0
      %815 = vmatprep.subr.bf16.mxu0 0
      %816 = vmatpush1.bf16.msra.mxu0 0
      %817 = vmatprep.subr.bf16.mxu0 0
      %818 = vmatpush1.bf16.msra.mxu0 0
      %819 = vmatprep.subr.bf16.mxu0 0
      %820 = vmatpush1.bf16.msra.mxu0 0
      %821 = vmatprep.subr.bf16.mxu0 0
      %822 = vmatpush1.bf16.msra.mxu0 0
      %823 = vmatprep.subr.bf16.mxu0 0
      %824 = vmatpush1.bf16.msra.mxu0 0
      %825 = vmatprep.subr.bf16.mxu0 0
      %826 = vmatpush1.bf16.msra.mxu0 0
      %827 = vmatprep.subr.bf16.mxu0 0
      %828 = vmatpush1.bf16.msra.mxu0 0
      %829 = vmatprep.subr.bf16.mxu0 0
      %830 = vmatpush1.bf16.msra.mxu0 0
      %831 = vmatprep.subr.bf16.mxu0 0
      %832 = vmatpush1.bf16.msra.mxu0 0
      %833 = vmatprep.subr.bf16.mxu0 0
      %834 = vmatpush1.bf16.msra.mxu0 0
      %835 = vmatprep.mubr.bf16.mxu0 0
      %836 = vmatmul.mubr.bf16.gmra.mrb[0].mxu0 %v798
      %v837 = vpop.f32.mrb[0].mxu0
      %v838 = vadd.f32 0.0, %v837
      %v839 = vpop.f32.mrb[0].mxu0
      %v840 = vpop.f32.mrb[0].mxu0
      %v841 = vpop.f32.mrb[0].mxu0
      %842 = vdwg.mxu0
      %v844 = vsel %vm243, %v224, 0
      %v847 = vsel %vm247, %v240, 0
      %849 = vmatprep.subr.bf16.mxu0 0
      %850 = vmatpush1.bf16.msra.mxu0 %v847
      %851 = vmatprep.subr.bf16.mxu0 0
      %852 = vmatpush1.bf16.msra.mxu0 0
      %853 = vmatprep.subr.bf16.mxu0 0
      %854 = vmatpush1.bf16.msra.mxu0 0
      %855 = vmatprep.subr.bf16.mxu0 0
      %856 = vmatpush1.bf16.msra.mxu0 0
      %857 = vmatprep.subr.bf16.mxu0 0
      %858 = vmatpush1.bf16.msra.mxu0 0
      %859 = vmatprep.subr.bf16.mxu0 0
      %860 = vmatpush1.bf16.msra.mxu0 0
      %861 = vmatprep.subr.bf16.mxu0 0
      %862 = vmatpush1.bf16.msra.mxu0 0
      %863 = vmatprep.subr.bf16.mxu0 0
      %864 = vmatpush1.bf16.msra.mxu0 0
      %865 = vmatprep.subr.bf16.mxu0 0
      %866 = vmatpush1.bf16.msra.mxu0 0
      %867 = vmatprep.subr.bf16.mxu0 0
      %868 = vmatpush1.bf16.msra.mxu0 0
      %869 = vmatprep.subr.bf16.mxu0 0
      %870 = vmatpush1.bf16.msra.mxu0 0
      %871 = vmatprep.subr.bf16.mxu0 0
      %872 = vmatpush1.bf16.msra.mxu0 0
      %873 = vmatprep.subr.bf16.mxu0 0
      %874 = vmatpush1.bf16.msra.mxu0 0
      %875 = vmatprep.subr.bf16.mxu0 0
      %876 = vmatpush1.bf16.msra.mxu0 0
      %877 = vmatprep.subr.bf16.mxu0 0
      %878 = vmatpush1.bf16.msra.mxu0 0
      %879 = vmatprep.subr.bf16.mxu0 0
      %880 = vmatpush1.bf16.msra.mxu0 0
      %881 = vmatprep.mubr.bf16.mxu0 0
      %882 = vmatmul.mubr.bf16.gmra.mrb[0].mxu0 %v844
      %v883 = vpop.f32.mrb[0].mxu0
      %v884 = vadd.f32 0.0, %v883
      %v885 = vpop.f32.mrb[0].mxu0
      %v886 = vpop.f32.mrb[0].mxu0
      %v887 = vpop.f32.mrb[0].mxu0
      %888 = vdwg.mxu0
      %v890 = vsel %vm243, %v225, 0
      %v893 = vsel %vm247, %v241, 0
      %895 = vmatprep.subr.bf16.mxu0 0
      %896 = vmatpush1.bf16.msra.mxu0 %v893
      %897 = vmatprep.subr.bf16.mxu0 0
      %898 = vmatpush1.bf16.msra.mxu0 0
      %899 = vmatprep.subr.bf16.mxu0 0
      %900 = vmatpush1.bf16.msra.mxu0 0
      %901 = vmatprep.subr.bf16.mxu0 0
      %902 = vmatpush1.bf16.msra.mxu0 0
      %903 = vmatprep.subr.bf16.mxu0 0
      %904 = vmatpush1.bf16.msra.mxu0 0
      %905 = vmatprep.subr.bf16.mxu0 0
      %906 = vmatpush1.bf16.msra.mxu0 0
      %907 = vmatprep.subr.bf16.mxu0 0
      %908 = vmatpush1.bf16.msra.mxu0 0
      %909 = vmatprep.subr.bf16.mxu0 0
      %910 = vmatpush1.bf16.msra.mxu0 0
      %911 = vmatprep.subr.bf16.mxu0 0
      %912 = vmatpush1.bf16.msra.mxu0 0
      %913 = vmatprep.subr.bf16.mxu0 0
      %914 = vmatpush1.bf16.msra.mxu0 0
      %915 = vmatprep.subr.bf16.mxu0 0
      %916 = vmatpush1.bf16.msra.mxu0 0
      %917 = vmatprep.subr.bf16.mxu0 0
      %918 = vmatpush1.bf16.msra.mxu0 0
      %919 = vmatprep.subr.bf16.mxu0 0
      %920 = vmatpush1.bf16.msra.mxu0 0
      %921 = vmatprep.subr.bf16.mxu0 0
      %922 = vmatpush1.bf16.msra.mxu0 0
      %923 = vmatprep.subr.bf16.mxu0 0
      %924 = vmatpush1.bf16.msra.mxu0 0
      %925 = vmatprep.subr.bf16.mxu0 0
      %926 = vmatpush1.bf16.msra.mxu0 0
      %927 = vmatprep.mubr.bf16.mxu0 0
      %928 = vmatmul.mubr.bf16.gmra.mrb[0].mxu0 %v890
      %v929 = vpop.f32.mrb[0].mxu0
      %v930 = vadd.f32 0.0, %v929
      %v931 = vpop.f32.mrb[0].mxu0
      %v932 = vpop.f32.mrb[0].mxu0
      %v933 = vpop.f32.mrb[0].mxu0
      %934 = vdwg.mxu0
      %v936 = vsel %vm243, %v226, 0
      %v939 = vsel %vm247, %v242, 0
      %941 = vmatprep.subr.bf16.mxu0 0
      %942 = vmatpush1.bf16.msra.mxu0 %v939
      %943 = vmatprep.subr.bf16.mxu0 0
      %944 = vmatpush1.bf16.msra.mxu0 0
      %945 = vmatprep.subr.bf16.mxu0 0
      %946 = vmatpush1.bf16.msra.mxu0 0
      %947 = vmatprep.subr.bf16.mxu0 0
      %948 = vmatpush1.bf16.msra.mxu0 0
      %949 = vmatprep.subr.bf16.mxu0 0
      %950 = vmatpush1.bf16.msra.mxu0 0
      %951 = vmatprep.subr.bf16.mxu0 0
      %952 = vmatpush1.bf16.msra.mxu0 0
      %953 = vmatprep.subr.bf16.mxu0 0
      %954 = vmatpush1.bf16.msra.mxu0 0
      %955 = vmatprep.subr.bf16.mxu0 0
      %956 = vmatpush1.bf16.msra.mxu0 0
      %957 = vmatprep.subr.bf16.mxu0 0
      %958 = vmatpush1.bf16.msra.mxu0 0
      %959 = vmatprep.subr.bf16.mxu0 0
      %960 = vmatpush1.bf16.msra.mxu0 0
      %961 = vmatprep.subr.bf16.mxu0 0
      %962 = vmatpush1.bf16.msra.mxu0 0
      %963 = vmatprep.subr.bf16.mxu0 0
      %964 = vmatpush1.bf16.msra.mxu0 0
      %965 = vmatprep.subr.bf16.mxu0 0
      %966 = vmatpush1.bf16.msra.mxu0 0
      %967 = vmatprep.subr.bf16.mxu0 0
      %968 = vmatpush1.bf16.msra.mxu0 0
      %969 = vmatprep.subr.bf16.mxu0 0
      %970 = vmatpush1.bf16.msra.mxu0 0
      %971 = vmatprep.subr.bf16.mxu0 0
      %972 = vmatpush1.bf16.msra.mxu0 0
      %973 = vmatprep.mubr.bf16.mxu0 0
      %974 = vmatmul.mubr.bf16.gmra.mrb[0].mxu0 %v936
      %v975 = vpop.f32.mrb[0].mxu0
      %v976 = vadd.f32 0.0, %v975
      %v977 = vpop.f32.mrb[0].mxu0
      %v978 = vpop.f32.mrb[0].mxu0
      %v979 = vpop.f32.mrb[0].mxu0
      %980 = vdwg.mxu0
      %v997 = vrot.slane %v286, 2
      %v998 = vrot.slane %v332, 2
      %v999 = vrot.slane %v378, 2
      %v1000 = vrot.slane %v424, 2
      %v1001 = vrot.slane %v470, 2
      %v1002 = vrot.slane %v516, 2
      %v1003 = vrot.slane %v562, 2
      %v1004 = vrot.slane %v608, 2
      %v1005 = vrot.slane %v654, 2
      %v1006 = vrot.slane %v700, 2
      %v1007 = vrot.slane %v746, 2
      %v1008 = vrot.slane %v792, 2
      %v1009 = vrot.slane %v838, 2
      %v1010 = vrot.slane %v884, 2
      %v1011 = vrot.slane %v930, 2
      %v1012 = vrot.slane %v976, 2
      %1013 = vrot.lane.b32.xlu0 %v997, 124
      %v1014 = vpop.permute.xlu0 %1013
      %1015 = vrot.lane.b32.xlu0 %v998, 124
      %v1016 = vpop.permute.xlu0 %1015
      %1017 = vrot.lane.b32.xlu0 %v999, 124
      %v1018 = vpop.permute.xlu0 %1017
      %1019 = vrot.lane.b32.xlu0 %v1000, 124
      %v1020 = vpop.permute.xlu0 %1019
      %1021 = vrot.lane.b32.xlu0 %v1001, 124
      %v1022 = vpop.permute.xlu0 %1021
      %1023 = vrot.lane.b32.xlu0 %v1002, 124
      %v1024 = vpop.permute.xlu0 %1023
      %1025 = vrot.lane.b32.xlu0 %v1003, 124
      %v1026 = vpop.permute.xlu0 %1025
      %1027 = vrot.lane.b32.xlu0 %v1004, 124
      %v1028 = vpop.permute.xlu0 %1027
      %1029 = vrot.lane.b32.xlu0 %v1005, 124
      %v1030 = vpop.permute.xlu0 %1029
      %1031 = vrot.lane.b32.xlu0 %v1006, 124
      %v1032 = vpop.permute.xlu0 %1031
      %1033 = vrot.lane.b32.xlu0 %v1007, 124
      %v1034 = vpop.permute.xlu0 %1033
      %1035 = vrot.lane.b32.xlu0 %v1008, 124
      %v1036 = vpop.permute.xlu0 %1035
      %1037 = vrot.lane.b32.xlu0 %v1009, 124
      %v1038 = vpop.permute.xlu0 %1037
      %1039 = vrot.lane.b32.xlu0 %v1010, 124
      %v1040 = vpop.permute.xlu0 %1039
      %1041 = vrot.lane.b32.xlu0 %v1011, 124
      %v1042 = vpop.permute.xlu0 %1041
      %1043 = vrot.lane.b32.xlu0 %v1012, 124
      %v1044 = vpop.permute.xlu0 %1043
      %v1061 = vsub.f32 %v286, %v1014
      %v1062 = vsub.f32 %v332, %v1016
      %v1063 = vsub.f32 %v378, %v1018
      %v1064 = vsub.f32 %v424, %v1020
      %v1065 = vsub.f32 %v470, %v1022
      %v1066 = vsub.f32 %v516, %v1024
      %v1067 = vsub.f32 %v562, %v1026
      %v1068 = vsub.f32 %v608, %v1028
      %v1069 = vsub.f32 %v654, %v1030
      %v1070 = vsub.f32 %v700, %v1032
      %v1071 = vsub.f32 %v746, %v1034
      %v1072 = vsub.f32 %v792, %v1036
      %v1073 = vsub.f32 %v838, %v1038
      %v1074 = vsub.f32 %v884, %v1040
      %v1075 = vsub.f32 %v930, %v1042
      %v1076 = vsub.f32 %v976, %v1044
      %vm1077 = vcmask 25600
      %1078 = vst.msk [vmem:[%s202] sm:$0x3] %vm1077, %v1061
      %1079 = vst.msk [vmem:[%s202 + $0x2] sm:$0x3] %vm1077, %v1062
      %1080 = vst.msk [vmem:[%s202 + $0x4] sm:$0x3] %vm1077, %v1063
      %1081 = vst.msk [vmem:[%s202 + $0x6] sm:$0x3] %vm1077, %v1064
      %1082 = vst.msk [vmem:[%s202 + $0x8] sm:$0x3] %vm1077, %v1065
      %1083 = vst.msk [vmem:[%s202 + $0xa] sm:$0x3] %vm1077, %v1066
      %1084 = vst.msk [vmem:[%s202 + $0xc] sm:$0x3] %vm1077, %v1067
      %1085 = vst.msk [vmem:[%s202 + $0xe] sm:$0x3] %vm1077, %v1068
      %1086 = vst.msk [vmem:[%s202 + $0x10] sm:$0x3] %vm1077, %v1069
      %1087 = vst.msk [vmem:[%s202 + $0x12] sm:$0x3] %vm1077, %v1070
      %1088 = vst.msk [vmem:[%s202 + $0x14] sm:$0x3] %vm1077, %v1071
      %1089 = vst.msk [vmem:[%s202 + $0x16] sm:$0x3] %vm1077, %v1072
      %1090 = vst.msk [vmem:[%s202 + $0x18] sm:$0x3] %vm1077, %v1073
      %1091 = vst.msk [vmem:[%s202 + $0x1a] sm:$0x3] %vm1077, %v1074
      %1092 = vst.msk [vmem:[%s202 + $0x1c] sm:$0x3] %vm1077, %v1075
      %1093 = vst.msk [vmem:[%s202 + $0x1e] sm:$0x3] %vm1077, %v1076
      %1094 = vrot.lane.b32.xlu0 %v997, 4
      %v1095 = vpop.permute.xlu0 %1094
      %1096 = vrot.lane.b32.xlu0 %v998, 4
      %v1097 = vpop.permute.xlu0 %1096
      %1098 = vrot.lane.b32.xlu0 %v999, 4
      %v1099 = vpop.permute.xlu0 %1098
      %1100 = vrot.lane.b32.xlu0 %v1000, 4
      %v1101 = vpop.permute.xlu0 %1100
      %1102 = vrot.lane.b32.xlu0 %v1001, 4
      %v1103 = vpop.permute.xlu0 %1102
      %1104 = vrot.lane.b32.xlu0 %v1002, 4
      %v1105 = vpop.permute.xlu0 %1104
      %1106 = vrot.lane.b32.xlu0 %v1003, 4
      %v1107 = vpop.permute.xlu0 %1106
      %1108 = vrot.lane.b32.xlu0 %v1004, 4
      %v1109 = vpop.permute.xlu0 %1108
      %1110 = vrot.lane.b32.xlu0 %v1005, 4
      %v1111 = vpop.permute.xlu0 %1110
      %1112 = vrot.lane.b32.xlu0 %v1006, 4
      %v1113 = vpop.permute.xlu0 %1112
      %1114 = vrot.lane.b32.xlu0 %v1007, 4
      %v1115 = vpop.permute.xlu0 %1114
      %1116 = vrot.lane.b32.xlu0 %v1008, 4
      %v1117 = vpop.permute.xlu0 %1116
      %1118 = vrot.lane.b32.xlu0 %v1009, 4
      %v1119 = vpop.permute.xlu0 %1118
      %1120 = vrot.lane.b32.xlu0 %v1010, 4
      %v1121 = vpop.permute.xlu0 %1120
      %1122 = vrot.lane.b32.xlu0 %v1011, 4
      %v1123 = vpop.permute.xlu0 %1122
      %1124 = vrot.lane.b32.xlu0 %v1012, 4
      %v1125 = vpop.permute.xlu0 %1124
      %v1142 = vadd.f32 %v286, %v1095
      %v1143 = vadd.f32 %v332, %v1097
      %v1144 = vadd.f32 %v378, %v1099
      %v1145 = vadd.f32 %v424, %v1101
      %v1146 = vadd.f32 %v470, %v1103
      %v1147 = vadd.f32 %v516, %v1105
      %v1148 = vadd.f32 %v562, %v1107
      %v1149 = vadd.f32 %v608, %v1109
      %v1150 = vadd.f32 %v654, %v1111
      %v1151 = vadd.f32 %v700, %v1113
      %v1152 = vadd.f32 %v746, %v1115
      %v1153 = vadd.f32 %v792, %v1117
      %v1154 = vadd.f32 %v838, %v1119
      %v1155 = vadd.f32 %v884, %v1121
      %v1156 = vadd.f32 %v930, %v1123
      %v1157 = vadd.f32 %v976, %v1125
      %1174 = vrot.lane.b32.xlu0 %v1142, 124
      %v1175 = vpop.permute.xlu0 %1174
      %1176 = vrot.lane.b32.xlu0 %v1143, 124
      %v1177 = vpop.permute.xlu0 %1176
      %1178 = vrot.lane.b32.xlu0 %v1144, 124
      %v1179 = vpop.permute.xlu0 %1178
      %1180 = vrot.lane.b32.xlu0 %v1145, 124
      %v1181 = vpop.permute.xlu0 %1180
      %1182 = vrot.lane.b32.xlu0 %v1146, 124
      %v1183 = vpop.permute.xlu0 %1182
      %1184 = vrot.lane.b32.xlu0 %v1147, 124
      %v1185 = vpop.permute.xlu0 %1184
      %1186 = vrot.lane.b32.xlu0 %v1148, 124
      %v1187 = vpop.permute.xlu0 %1186
      %1188 = vrot.lane.b32.xlu0 %v1149, 124
      %v1189 = vpop.permute.xlu0 %1188
      %1190 = vrot.lane.b32.xlu0 %v1150, 124
      %v1191 = vpop.permute.xlu0 %1190
      %1192 = vrot.lane.b32.xlu0 %v1151, 124
      %v1193 = vpop.permute.xlu0 %1192
      %1194 = vrot.lane.b32.xlu0 %v1152, 124
      %v1195 = vpop.permute.xlu0 %1194
      %1196 = vrot.lane.b32.xlu0 %v1153, 124
      %v1197 = vpop.permute.xlu0 %1196
      %1198 = vrot.lane.b32.xlu0 %v1154, 124
      %v1199 = vpop.permute.xlu0 %1198
      %1200 = vrot.lane.b32.xlu0 %v1155, 124
      %v1201 = vpop.permute.xlu0 %1200
      %1202 = vrot.lane.b32.xlu0 %v1156, 124
      %v1203 = vpop.permute.xlu0 %1202
      %1204 = vrot.lane.b32.xlu0 %v1157, 124
      %v1205 = vpop.permute.xlu0 %1204
      %1222 = vst.msk [vmem:[%s208] sm:$0x3] %vm1077, %v1175
      %1223 = vst.msk [vmem:[%s208 + $0x2] sm:$0x3] %vm1077, %v1177
      %1224 = vst.msk [vmem:[%s208 + $0x4] sm:$0x3] %vm1077, %v1179
      %1225 = vst.msk [vmem:[%s208 + $0x6] sm:$0x3] %vm1077, %v1181
      %1226 = vst.msk [vmem:[%s208 + $0x8] sm:$0x3] %vm1077, %v1183
      %1227 = vst.msk [vmem:[%s208 + $0xa] sm:$0x3] %vm1077, %v1185
      %1228 = vst.msk [vmem:[%s208 + $0xc] sm:$0x3] %vm1077, %v1187
      %1229 = vst.msk [vmem:[%s208 + $0xe] sm:$0x3] %vm1077, %v1189
      %1230 = vst.msk [vmem:[%s208 + $0x10] sm:$0x3] %vm1077, %v1191
      %1231 = vst.msk [vmem:[%s208 + $0x12] sm:$0x3] %vm1077, %v1193
      %1232 = vst.msk [vmem:[%s208 + $0x14] sm:$0x3] %vm1077, %v1195
      %1233 = vst.msk [vmem:[%s208 + $0x16] sm:$0x3] %vm1077, %v1197
      %1234 = vst.msk [vmem:[%s208 + $0x18] sm:$0x3] %vm1077, %v1199
      %1235 = vst.msk [vmem:[%s208 + $0x1a] sm:$0x3] %vm1077, %v1201
      %1236 = vst.msk [vmem:[%s208 + $0x1c] sm:$0x3] %vm1077, %v1203
      %1237 = vst.msk [vmem:[%s208 + $0x1e] sm:$0x3] %vm1077, %v1205
      %s1238 = smul.u32 16, %s15
      %p1239 = scmp.lt.s32.totalorder %s1238, 31
      %s1240 = scalar_select %p1239, %s1238, 31
      %s1241 = smul.addr %s1240, 2
      %s1242 = scalar_lea.vmem %s2, %s1241
      %s1243 = smul.u32 16, %s15
      %p1244 = scmp.lt.s32.totalorder %s1243, 31
      %s1245 = scalar_select %p1244, %s1243, 31
      %s1246 = smul.addr %s1245, 2
      %s1247 = scalar_lea.vmem %s3, %s1246
      // Predicated region
      $region29: #{fourier_basic_block.4} parent=27 // pred_check
        %p1248 = pneg %p85
      $region30: #{fourier_basic_block.4} parent=27 // pred_check_branch
        %1250 = sbr.rel (%p1248) target = $region32
      $region31: #{fourier_basic_block.4} parent=27 // pred_region
        %s1251 = smul.u32 16, %s15
      $region32: #{fourier_basic_block.4} parent=27 // pred_fallthru
        _
      // Predicated region
      $region33: #{fourier_basic_block.4} parent=27 // pred_check
        %p1252 = pneg %p111
      $region34: #{fourier_basic_block.4} parent=27 // pred_check_branch
        %1254 = sbr.rel (%p1252) target = $region36
      $region35: #{fourier_basic_block.4} parent=27 // pred_region
        %s1255 = smul.u32 16, %s15
      $region36: #{fourier_basic_block.4} parent=27 // pred_fallthru
        _
    $region28: #{fourier_basic_block.4} parent=5 // pred_fallthru
      _
    %p1256 = scmp.le.s32.totalorder 2, %s10
    // Predicated region
    $region37: #{fourier_basic_block.4} parent=5 // pred_check
      %p1257 = pneg %p1256
    $region38: #{fourier_basic_block.4} parent=5 // pred_check_branch
      %1259 = sbr.rel (%p1257) target = $region40
    $region39: #{fourier_basic_block.4} parent=5 // pred_region
      %s1260 = ssub.s32 %s10, 2
      // Predicated region
      $region41: #{fourier_basic_block.4} parent=39 // pred_check
        %p1261 = pneg %p91
      $region42: #{fourier_basic_block.4} parent=39 // pred_check_branch
        %1263 = sbr.rel (%p1261) target = $region44
      $region43: #{fourier_basic_block.4} parent=39 // pred_region
        %s1264 = smul.u32 16, %s16
        %p1265 = scmp.lt.s32.totalorder %s1264, 31
        %s1266 = scalar_select %p1265, %s1264, 31
        %s1267 = smul.addr %s1266, 2
        %s1268 = scalar_lea.vmem %s2, %s1267
      $region44: #{fourier_basic_block.4} parent=39 // pred_fallthru
        _
      // Predicated region
      $region45: #{fourier_basic_block.4} parent=39 // pred_check
        %p1269 = pneg %p117
      $region46: #{fourier_basic_block.4} parent=39 // pred_check_branch
        %1271 = sbr.rel (%p1269) target = $region48
      $region47: #{fourier_basic_block.4} parent=39 // pred_region
        %s1272 = smul.u32 16, %s16
        %p1273 = scmp.lt.s32.totalorder %s1272, 31
        %s1274 = scalar_select %p1273, %s1272, 31
        %s1275 = smul.addr %s1274, 2
        %s1276 = scalar_lea.vmem %s3, %s1275
      $region48: #{fourier_basic_block.4} parent=39 // pred_fallthru
        _
    $region40: #{fourier_basic_block.4} parent=5 // pred_fallthru
      _
  $region6: #{fourier_basic_block.4} parent=0 // loop_footer
    %s14 = sadd.s32 1, %s10
  $region7: #{fourier_basic_block.4} parent=0 // loop_footer_branch
    %9 = sbr.rel target = $region3
  $region8: #{fourier_basic_block.4} parent=0 // loop_exit
    _

// kernel: fourier_basic_block.5
$region0: #{fourier_basic_block.5}
  #allocation0 [shape = 'u32[]', space=smem, size = 0x4, offset = 0x4, fixed_abs, tag = 'smem constant byte address 0x4 - core index']
  #allocation1 [shape = 'u32[144,128]{1,0:T(1,128)}', space=vmem, size = 0x12000, scoped, tag = 'internal scratch']
  %s0 = inlined_call_operand.vmem [shape: f32[2,4,256], index: 0, kind: input, shape index: {}]
  %s1 = inlined_call_operand.vmem [shape: bf16[4,4], index: 1, kind: input, shape index: {}]
  %s2 = inlined_call_operand.vmem [shape: f32[4,1], index: 2, kind: input, shape index: {}]
  %s3 = inlined_call_operand.vmem [shape: f32[2,4,256], index: 3, kind: input, shape index: {}]
  %s4 = inlined_call_operand.vmem [shape: f32[2,4,256], index: 4, kind: output, shape index: {}]
  %s5 = sld [smem:[#allocation0]]
  $region49: #{fourier_basic_block.5} parent=0
    _
  %s7 = ssub.s32 1, %s5
  %s8 = scalar_select 0, %s7, %s5
  loop: start=0, step=1, limit=4
  $region2: #{fourier_basic_block.5} parent=0 // loop_pre_header
    _
  $region3: #{fourier_basic_block.5} parent=0 // loop_header
    %s10 = sphi 0, %s14
    %p11 = scmp.ge.s32.totalorder %s10, 4
    %s17 = sphi 0, %s29
    %s18 = sphi 0, %s25
    %s19 = sphi 0, %s17
    %s20 = sphi 0, %s18
    %s21 = sphi 0, %s19
    %s22 = sphi 0, %s20
    %s34 = sphi 0, %s36
    %s37 = sphi 0, %s34
    %s38 = sphi 0, %s37
    %s54 = sphi 0, %s38
    %s58 = sphi 0, %s58
    %s60 = sphi 0, %s58
    %s61 = sphi 0, %s60
    %s75 = sphi 0, %s61
    %s79 = sphi 0, %s79
    %s81 = sphi 0, %s79
    %s82 = sphi 0, %s81
    %s96 = sphi 0, %s82
    %s104 = sphi 0, %s106
    %s107 = sphi 0, %s104
    %s108 = sphi 0, %s107
    %s124 = sphi 0, %s108
    %s132 = sphi 0, %s134
    %s135 = sphi 0, %s132
    %s136 = sphi 0, %s135
    %s152 = sphi 0, %s136
  $region4: #{fourier_basic_block.5} parent=0 // loop_header_branch
    %13 = sbr.rel (%p11) target = $region8
  $region5: #{fourier_basic_block.5} parent=0 // loop_body
    %s15 = ssub.s32 %s10, 1
    %s16 = ssub.s32 %s10, 2
    %s23 = sadd.s32 1, %s18
    %p24 = scmp.ge.s32.totalorder %s23, 1
    %s25 = scalar_select %p24, 0, %s23
    %s26 = sadd.s32 1, %s17
    %s27 = scalar_select %p24, %s26, %s17
    %p28 = scmp.ge.s32.totalorder %s27, 2
    %s29 = scalar_select %p28, 0, %s27
    %s30 = ssub.s32 %s17, %s29
    %s31 = ssub.s32 %s18, %s25
    %s32 = sor.u32 %s30, %s31
    %p33 = scmp.eq.s32.totalorder %s32, 0
    %s35 = sadd.s32 %s34, 1
    %s36 = scalar_select %p33, %s34, %s35
    %p39 = pneg %p33
    %p40 = scmp.eq.s32.totalorder %s10, 1
    %p41 = por %p39, %p40
    %p42 = scmp.ne.s32.totalorder %s34, %s37
    %p43 = scmp.eq.s32.totalorder %s10, 0
    %p44 = por %p42, %p43
    %p45 = scmp.ne.s32.totalorder %s34, %s37
    %p46 = scmp.eq.s32.totalorder %s15, 1
    %p47 = por %p45, %p46
    %p48 = scmp.ne.s32.totalorder %s37, %s38
    %p49 = scmp.eq.s32.totalorder %s15, 0
    %p50 = por %p48, %p49
    %p51 = scmp.ne.s32.totalorder %s37, %s38
    %p52 = scmp.eq.s32.totalorder %s16, 1
    %p53 = por %p51, %p52
    %p55 = scmp.ne.s32.totalorder %s38, %s54
    %p56 = scmp.eq.s32.totalorder %s16, 0
    %p57 = por %p55, %p56
    %s59 = sadd.s32 %s58, 1
    %p62 = scmp.eq.s32.totalorder %s10, 1
    %p63 = scmp.ne.s32.totalorder %s58, %s60
    %p64 = scmp.eq.s32.totalorder %s10, 0
    %p65 = por %p63, %p64
    %p66 = scmp.ne.s32.totalorder %s58, %s60
    %p67 = scmp.eq.s32.totalorder %s15, 1
    %p68 = por %p66, %p67
    %p69 = scmp.ne.s32.totalorder %s60, %s61
    %p70 = scmp.eq.s32.totalorder %s15, 0
    %p71 = por %p69, %p70
    %p72 = scmp.ne.s32.totalorder %s60, %s61
    %p73 = scmp.eq.s32.totalorder %s16, 1
    %p74 = por %p72, %p73
    %p76 = scmp.ne.s32.totalorder %s61, %s75
    %p77 = scmp.eq.s32.totalorder %s16, 0
    %p78 = por %p76, %p77
    %s80 = sadd.s32 %s79, 1
    %p83 = scmp.eq.s32.totalorder %s10, 1
    %p84 = scmp.ne.s32.totalorder %s79, %s81
    %p85 = scmp.eq.s32.totalorder %s10, 0
    %p86 = por %p84, %p85
    %p87 = scmp.ne.s32.totalorder %s79, %s81
    %p88 = scmp.eq.s32.totalorder %s15, 1
    %p89 = por %p87, %p88
    %p90 = scmp.ne.s32.totalorder %s81, %s82
    %p91 = scmp.eq.s32.totalorder %s15, 0
    %p92 = por %p90, %p91
    %p93 = scmp.ne.s32.totalorder %s81, %s82
    %p94 = scmp.eq.s32.totalorder %s16, 1
    %p95 = por %p93, %p94
    %p97 = scmp.ne.s32.totalorder %s82, %s96
    %p98 = scmp.eq.s32.totalorder %s16, 0
    %p99 = por %p97, %p98
    %s100 = ssub.s32 %s17, %s29
    %s101 = ssub.s32 %s18, %s25
    %s102 = sor.u32 %s100, %s101
    %p103 = scmp.eq.s32.totalorder %s102, 0
    %s105 = sadd.s32 %s104, 1
    %s106 = scalar_select %p103, %s104, %s105
    %p109 = pneg %p103
    %p110 = scmp.eq.s32.totalorder %s10, 1
    %p111 = por %p109, %p110
    %p112 = scmp.ne.s32.totalorder %s104, %s107
    %p113 = scmp.eq.s32.totalorder %s10, 0
    %p114 = por %p112, %p113
    %p115 = scmp.ne.s32.totalorder %s104, %s107
    %p116 = scmp.eq.s32.totalorder %s15, 1
    %p117 = por %p115, %p116
    %p118 = scmp.ne.s32.totalorder %s107, %s108
    %p119 = scmp.eq.s32.totalorder %s15, 0
    %p120 = por %p118, %p119
    %p121 = scmp.ne.s32.totalorder %s107, %s108
    %p122 = scmp.eq.s32.totalorder %s16, 1
    %p123 = por %p121, %p122
    %p125 = scmp.ne.s32.totalorder %s108, %s124
    %p126 = scmp.eq.s32.totalorder %s16, 0
    %p127 = por %p125, %p126
    %s128 = ssub.s32 %s17, %s29
    %s129 = ssub.s32 %s18, %s25
    %s130 = sor.u32 %s128, %s129
    %p131 = scmp.eq.s32.totalorder %s130, 0
    %s133 = sadd.s32 %s132, 1
    %s134 = scalar_select %p131, %s132, %s133
    %p137 = pneg %p131
    %p138 = scmp.eq.s32.totalorder %s10, 1
    %p139 = por %p137, %p138
    %p140 = scmp.ne.s32.totalorder %s132, %s135
    %p141 = scmp.eq.s32.totalorder %s10, 0
    %p142 = por %p140, %p141
    %p143 = scmp.ne.s32.totalorder %s132, %s135
    %p144 = scmp.eq.s32.totalorder %s15, 1
    %p145 = por %p143, %p144
    %p146 = scmp.ne.s32.totalorder %s135, %s136
    %p147 = scmp.eq.s32.totalorder %s15, 0
    %p148 = por %p146, %p147
    %p149 = scmp.ne.s32.totalorder %s135, %s136
    %p150 = scmp.eq.s32.totalorder %s16, 1
    %p151 = por %p149, %p150
    %p153 = scmp.ne.s32.totalorder %s136, %s152
    %p154 = scmp.eq.s32.totalorder %s16, 0
    %p155 = por %p153, %p154
    %p156 = scmp.le.s32.totalorder 1, %s10
    %p157 = scmp.lt.s32.totalorder %s10, 3
    %p158 = pnand %p156, %p157
    %p159 = pneg %p158
    // Predicated region
    $region9: #{fourier_basic_block.5} parent=5 // pred_check
      _
    $region10: #{fourier_basic_block.5} parent=5 // pred_check_branch
      %161 = sbr.rel (%p158) target = $region12
    $region11: #{fourier_basic_block.5} parent=5 // pred_region
      %s162 = ssub.s32 %s10, 1
      // Predicated region
      $region13: #{fourier_basic_block.5} parent=11 // pred_check
        %p163 = pneg %p71
      $region14: #{fourier_basic_block.5} parent=11 // pred_check_branch
        %165 = sbr.rel (%p163) target = $region16
      $region15: #{fourier_basic_block.5} parent=11 // pred_region
        _
      $region16: #{fourier_basic_block.5} parent=11 // pred_fallthru
        _
      // Predicated region
      $region17: #{fourier_basic_block.5} parent=11 // pred_check
        %p166 = pneg %p92
      $region18: #{fourier_basic_block.5} parent=11 // pred_check_branch
        %168 = sbr.rel (%p166) target = $region20
      $region19: #{fourier_basic_block.5} parent=11 // pred_region
        _
      $region20: #{fourier_basic_block.5} parent=11 // pred_fallthru
        _
    $region12: #{fourier_basic_block.5} parent=5 // pred_fallthru
      _
    %p169 = scmp.lt.s32.totalorder %s10, 2
    // Predicated region
    $region21: #{fourier_basic_block.5} parent=5 // pred_check
      %p170 = pneg %p169
    $region22: #{fourier_basic_block.5} parent=5 // pred_check_branch
      %172 = sbr.rel (%p170) target = $region24
    $region23: #{fourier_basic_block.5} parent=5 // pred_region
      // Predicated region
      $region25: #{fourier_basic_block.5} parent=23 // pred_check
        %p173 = pneg %p44
      $region26: #{fourier_basic_block.5} parent=23 // pred_check_branch
        %175 = sbr.rel (%p173) target = $region28
      $region27: #{fourier_basic_block.5} parent=23 // pred_region
        %s176 = smul.u32 2, %s18
        %p177 = scmp.lt.s32.totalorder %s17, 1
        %s178 = scalar_select %p177, %s17, 1
        %p179 = scmp.lt.s32.totalorder %s176, 1
        %s180 = scalar_select %p179, %s176, 1
        %s181 = smul.addr %s178, 2
        %s182 = sadd.s32 %s180, %s181
        %s183 = smul.addr %s182, 4
        %s184 = scalar_lea.vmem %s0, %s183
        %s185 = smul.u32 2, %s18
      $region28: #{fourier_basic_block.5} parent=23 // pred_fallthru
        _
      // Predicated region
      $region29: #{fourier_basic_block.5} parent=23 // pred_check
        %p186 = pneg %p114
      $region30: #{fourier_basic_block.5} parent=23 // pred_check_branch
        %188 = sbr.rel (%p186) target = $region32
      $region31: #{fourier_basic_block.5} parent=23 // pred_region
        %s189 = smul.u32 2, %s18
        %p190 = scmp.lt.s32.totalorder %s17, 1
        %s191 = scalar_select %p190, %s17, 1
        %p192 = scmp.lt.s32.totalorder %s189, 1
        %s193 = scalar_select %p192, %s189, 1
        %s194 = smul.addr %s191, 2
        %s195 = sadd.s32 %s193, %s194
        %s196 = smul.addr %s195, 4
        %s197 = scalar_lea.vmem %s3, %s196
        %s198 = smul.u32 2, %s18
      $region32: #{fourier_basic_block.5} parent=23 // pred_fallthru
        _
    $region24: #{fourier_basic_block.5} parent=5 // pred_fallthru
      _
    %p199 = scmp.le.s32.totalorder 1, %s10
    %p200 = scmp.lt.s32.totalorder %s10, 3
    %p201 = pnand %p199, %p200
    %p202 = pneg %p201
    // Predicated region
    $region33: #{fourier_basic_block.5} parent=5 // pred_check
      _
    $region34: #{fourier_basic_block.5} parent=5 // pred_check_branch
      %204 = sbr.rel (%p201) target = $region36
    $region35: #{fourier_basic_block.5} parent=5 // pred_region
      %s205 = ssub.s32 %s10, 1
      %s206 = smul.u32 2, %s20
      %p207 = scmp.lt.s32.totalorder %s19, 1
      %s208 = scalar_select %p207, %s19, 1
      %p209 = scmp.lt.s32.totalorder %s206, 1
      %s210 = scalar_select %p209, %s206, 1
      %s211 = smul.addr %s208, 2
      %s212 = sadd.s32 %s210, %s211
      %s213 = smul.addr %s212, 4
      %s214 = scalar_lea.vmem %s0, %s213
      %p215 = pneg %p50
      %p216 = pneg %p47
      %p217 = pneg %p71
      %p218 = pneg %p68
      %p219 = pneg %p92
      %p220 = pneg %p89
      %s221 = smul.u32 2, %s20
      %p222 = scmp.lt.s32.totalorder %s19, 1
      %s223 = scalar_select %p222, %s19, 1
      %p224 = scmp.lt.s32.totalorder %s221, 1
      %s225 = scalar_select %p224, %s221, 1
      %s226 = smul.addr %s223, 2
      %s227 = sadd.s32 %s225, %s226
      %s228 = smul.addr %s227, 4
      %s229 = scalar_lea.vmem %s3, %s228
      %p230 = pneg %p120
      %p231 = pneg %p117
      %p232 = pneg %p148
      %p233 = pneg %p145
      %s234 = smul.u32 2, %s20
      %p235 = scmp.lt.s32.totalorder %s19, 1
      %s236 = scalar_select %p235, %s19, 1
      %p237 = scmp.lt.s32.totalorder %s234, 1
      %s238 = scalar_select %p237, %s234, 1
      %s239 = smul.addr %s236, 2
      %s240 = sadd.s32 %s238, %s239
      %s241 = smul.addr %s240, 4
      %s242 = scalar_lea.vmem %s4, %s241
      %s243 = smul.u32 2, %s20
      %p244 = scmp.lt.s32.totalorder %s19, 1
      %s245 = scalar_select %p244, %s19, 1
      %p246 = scmp.lt.s32.totalorder %s243, 1
      %s247 = scalar_select %p246, %s243, 1
      %s248 = smul.addr %s245, 2
      %s249 = sadd.s32 %s247, %s248
      %s250 = smul.addr %s249, 4
      %s251 = scalar_lea.vmem %s0, %s250
      %s252 = smul.u32 2, %s20
      %s253 = smul.u32 2, %s20
      %p254 = scmp.lt.s32.totalorder %s19, 1
      %s255 = scalar_select %p254, %s19, 1
      %p256 = scmp.lt.s32.totalorder %s253, 1
      %s257 = scalar_select %p256, %s253, 1
      %s258 = smul.addr %s255, 2
      %s259 = sadd.s32 %s257, %s258
      %s260 = smul.addr %s259, 4
      %s261 = scalar_lea.vmem %s3, %s260
      %s262 = smul.u32 2, %s20
      %s263 = smul.u32 2, %s20
      %p264 = scmp.lt.s32.totalorder %s19, 1
      %s265 = scalar_select %p264, %s19, 1
      %p266 = scmp.lt.s32.totalorder %s263, 1
      %s267 = scalar_select %p266, %s263, 1
      %s268 = smul.addr %s265, 2
      %s269 = sadd.s32 %s267, %s268
      %s270 = smul.addr %s269, 4
      %s271 = scalar_lea.vmem %s4, %s270
      %s272 = smul.u32 2, %s20
      %v274 = vld [vmem:[%s251] sm:$0xff]
      %v276 = vcombine.high %v274, %v274
      %v278 = vpack.c.bf16 %v274, %v274
      %v279 = vpack.c.bf16 %v276, %v276
      %v280 = vld [vmem:[%s1] sm:$0x3]
      %v281 = vld [vmem:[%s2] sm:$0xf]
      %283 = vset.pattern.permute.xlu0 0
      %284 = vperm.xlu0 %283, %v281
      %v285 = vpop.permute.xlu0 %284
      %vm287 = vcmask 31744
      %v289 = vsel %vm287, %v280, 0
      %vm291 = vcmask 1041408
      %v293 = vsel %vm291, %v278, 0
      %v296 = vsel %vm291, %v279, 0
      %298 = vmatprep.subr.bf16.mxu0 %v296
      %299 = vmatpush1.bf16.msra.mxu0 %v293
      %300 = vmatprep.subr.bf16.mxu0 0
      %301 = vmatpush1.bf16.msra.mxu0 0
      %302 = vmatprep.subr.bf16.mxu0 0
      %303 = vmatpush1.bf16.msra.mxu0 0
      %304 = vmatprep.subr.bf16.mxu0 0
      %305 = vmatpush1.bf16.msra.mxu0 0
      %306 = vmatprep.subr.bf16.mxu0 0
      %307 = vmatpush1.bf16.msra.mxu0 0
      %308 = vmatprep.subr.bf16.mxu0 0
      %309 = vmatpush1.bf16.msra.mxu0 0
      %310 = vmatprep.subr.bf16.mxu0 0
      %311 = vmatpush1.bf16.msra.mxu0 0
      %312 = vmatprep.subr.bf16.mxu0 0
      %313 = vmatpush1.bf16.msra.mxu0 0
      %314 = vmatprep.subr.bf16.mxu0 0
      %315 = vmatpush1.bf16.msra.mxu0 0
      %316 = vmatprep.subr.bf16.mxu0 0
      %317 = vmatpush1.bf16.msra.mxu0 0
      %318 = vmatprep.subr.bf16.mxu0 0
      %319 = vmatpush1.bf16.msra.mxu0 0
      %320 = vmatprep.subr.bf16.mxu0 0
      %321 = vmatpush1.bf16.msra.mxu0 0
      %322 = vmatprep.subr.bf16.mxu0 0
      %323 = vmatpush1.bf16.msra.mxu0 0
      %324 = vmatprep.subr.bf16.mxu0 0
      %325 = vmatpush1.bf16.msra.mxu0 0
      %326 = vmatprep.subr.bf16.mxu0 0
      %327 = vmatpush1.bf16.msra.mxu0 0
      %328 = vmatprep.subr.bf16.mxu0 0
      %329 = vmatpush1.bf16.msra.mxu0 0
      %330 = vmatprep.mubr.bf16.mxu0 0
      %331 = vmatmul.mubr.bf16.gmra.mrb[0].mxu0 %v289
      %v332 = vpop.f32.mrb[0].mxu0
      %v333 = vadd.f32 %v285, %v332
      %v334 = vpop.f32.mrb[0].mxu0
      %v335 = vadd.f32 %v285, %v334
      %v336 = vpop.f32.mrb[0].mxu0
      %v337 = vpop.f32.mrb[0].mxu0
      %338 = vdwg.mxu0
      %v339 = vld [vmem:[%s261] sm:$0xff]
      %v341 = vcombine.high %v339, %v339
      %v343 = vadd.f32 %v333, %v339
      %v344 = vadd.f32 %v335, %v341
      %v345 = vmul.f32 %v343, 0.5
      %v346 = vmul.f32 %v344, 0.5
      %v347 = vmul.f32 %v343, 0.70710677
      %v348 = vmul.f32 %v344, 0.70710677
      %v349 = vand.u32 2147483647, %v347
      %v350 = vand.u32 2147483647, %v348
      %v351 = vmul.f32 %v349, 0.3275911
      %v352 = vmul.f32 %v350, 0.3275911
      %v353 = vadd.f32 %v351, 1.0
      %v354 = vadd.f32 %v352, 1.0
      %v355 = vrcp.pop %v353
      %v356 = vrcp.pop %v354
      %v357 = vmul.f32 %v355, 1.0614054
      %v358 = vmul.f32 %v356, 1.0614054
      %v359 = vadd.f32 %v357, -1.4531521
      %v360 = vadd.f32 %v358, -1.4531521
      %v361 = vmul.f32 %v355, %v359
      %v362 = vmul.f32 %v356, %v360
      %v363 = vadd.f32 %v361, 1.4214138
      %v364 = vadd.f32 %v362, 1.4214138
      %v365 = vmul.f32 %v355, %v363
      %v366 = vmul.f32 %v356, %v364
      %v367 = vadd.f32 %v365, -0.28449672
      %v368 = vadd.f32 %v366, -0.28449672
      %v369 = vmul.f32 %v355, %v367
      %v370 = vmul.f32 %v356, %v368
      %v371 = vadd.f32 %v369, 0.2548296
      %v372 = vadd.f32 %v370, 0.2548296
      %v373 = vmul.f32 %v355, %v371
      %v374 = vmul.f32 %v356, %v372
      %v375 = vsub.f32 0.0, %v349
      %v376 = vsub.f32 0.0, %v350
      %v377 = vmul.f32 %v375, %v349
      %v378 = vmul.f32 %v376, %v350
      %v379 = vmul.f32 %v377, 1.442695
      %v380 = vpow.pop %v379
      %v381 = vmul.f32 %v378, 1.442695
      %v382 = vpow.pop %v381
      %v383 = vmul.f32 %v373, %v380
      %v384 = vmul.f32 %v374, %v382
      %v385 = vsub.f32 1.0, %v383
      %v386 = vsub.f32 1.0, %v384
      %vm387 = vcmp.ge.f32.partialorder %v347, 0.0
      %vm388 = vcmp.ge.f32.partialorder %v348, 0.0
      %v389 = vsub.f32 0.0, %v385
      %v390 = vsub.f32 0.0, %v386
      %v391 = vsel %vm387, %v385, %v389
      %v392 = vsel %vm388, %v386, %v390
      %v393 = vadd.f32 %v391, 1.0
      %v394 = vadd.f32 %v392, 1.0
      %v395 = vmul.f32 %v345, %v393
      %v396 = vmul.f32 %v346, %v394
      %v399 = vcombine.low %v395, %v396
      %401 = vst [vmem:[%s271] sm:$0xff] %v399
      %s402 = smul.u32 2, %s20
      %p403 = scmp.lt.s32.totalorder %s19, 1
      %s404 = scalar_select %p403, %s19, 1
      %p405 = scmp.lt.s32.totalorder %s402, 1
      %s406 = scalar_select %p405, %s402, 1
      %s407 = smul.addr %s404, 2
      %s408 = sadd.s32 %s406, %s407
      %s409 = smul.addr %s408, 4
      %s410 = scalar_lea.vmem %s4, %s409
      // Predicated region
      $region37: #{fourier_basic_block.5} parent=35 // pred_check
        %p411 = pneg %p145
      $region38: #{fourier_basic_block.5} parent=35 // pred_check_branch
        %413 = sbr.rel (%p411) target = $region40
      $region39: #{fourier_basic_block.5} parent=35 // pred_region
        %s414 = smul.u32 2, %s20
      $region40: #{fourier_basic_block.5} parent=35 // pred_fallthru
        _
    $region36: #{fourier_basic_block.5} parent=5 // pred_fallthru
      _
    %p415 = scmp.le.s32.totalorder 2, %s10
    // Predicated region
    $region41: #{fourier_basic_block.5} parent=5 // pred_check
      %p416 = pneg %p415
    $region42: #{fourier_basic_block.5} parent=5 // pred_check_branch
      %418 = sbr.rel (%p416) target = $region44
    $region43: #{fourier_basic_block.5} parent=5 // pred_region
      %s419 = ssub.s32 %s10, 2
      // Predicated region
      $region45: #{fourier_basic_block.5} parent=43 // pred_check
        %p420 = pneg %p151
      $region46: #{fourier_basic_block.5} parent=43 // pred_check_branch
        %422 = sbr.rel (%p420) target = $region48
      $region47: #{fourier_basic_block.5} parent=43 // pred_region
        %s423 = smul.u32 2, %s22
        %p424 = scmp.lt.s32.totalorder %s21, 1
        %s425 = scalar_select %p424, %s21, 1
        %p426 = scmp.lt.s32.totalorder %s423, 1
        %s427 = scalar_select %p426, %s423, 1
        %s428 = smul.addr %s425, 2
        %s429 = sadd.s32 %s427, %s428
        %s430 = smul.addr %s429, 4
        %s431 = scalar_lea.vmem %s4, %s430
      $region48: #{fourier_basic_block.5} parent=43 // pred_fallthru
        _
    $region44: #{fourier_basic_block.5} parent=5 // pred_fallthru
      _
  $region6: #{fourier_basic_block.5} parent=0 // loop_footer
    %s14 = sadd.s32 1, %s10
  $region7: #{fourier_basic_block.5} parent=0 // loop_footer_branch
    %9 = sbr.rel target = $region3
  $region8: #{fourier_basic_block.5} parent=0 // loop_exit
    _

</llo_original>
